<compile_context>
chip_gen: v7x
topology: tpu7x:2x2x1
jax: 0.10.0
libtpu: 0.0.40
codegen_flags: <defaults>
</compile_context>

<pallas_src>
import jax
import jax.numpy as jnp
import numpy as np
from jax.experimental import pallas as pl
from jax.experimental.pallas import tpu as pltpu


# -----------------------------------------------------------------------------
# Pallas kernel
# -----------------------------------------------------------------------------
def _enc_dec_attn_kernel(
    x_ref,        # (T, B, 1)   input sequence, time-major
    ew_ih_ref,    # (1, 4H)     encoder input weights (row), gate order i|f|o|g
    eb_ref,       # (1, 4H)     encoder summed biases (b_ih + b_hh), same order
    dw_ih_ref,    # (1, 4H)     decoder input weights (row)
    db_ref,       # (1, 4H)     decoder summed biases
    ew_hh_ref,    # (H, 4H)     encoder hidden weights (W_hh.T), bf16
    dw_hh_ref,    # (H, 4H)     decoder hidden weights (W_hh.T), bf16
    fc_wc_ref,    # (1, H)      Linear(2H->1) weight half applied to the context
    fc_wh_ref,    # (1, H)      Linear(2H->1) weight half applied to decoder hidden
    fc_b_ref,     # (1, 1)      Linear bias
    out_ref,      # (B, T)      output
):
    T, B, _ = x_ref.shape
    H = ew_hh_ref.shape[0]

    x3 = x_ref[...]                                   # (T, B, 1)
    ew_ih, eb = ew_ih_ref[...], eb_ref[...]
    dw_ih, db = dw_ih_ref[...], db_ref[...]
    ew_hh, dw_hh = ew_hh_ref[...], dw_hh_ref[...]
    fc_wc, fc_wh = fc_wc_ref[...], fc_wh_ref[...]

    # In-kernel input projection for ALL timesteps (input size is 1, so
    # x @ W_ih.T is a broadcast multiply).  One vectorized pass; none of this
    # sits on the recurrence dependency chain.
    xp_enc = x3 * ew_ih[None, :, :] + eb[None, :, :]  # (T, B, 4H)
    xp_dec = x3 * dw_ih[None, :, :] + db[None, :, :]  # (T, B, 4H)

    def lstm_step(xp_t, h, c, w_hh_bf16):
        # Packed gate order i|f|o|g (sigmoid-contiguous).  bf16 MXU operands,
        # f32 accumulation.
        gates = xp_t + jnp.dot(h.astype(jnp.bfloat16), w_hh_bf16,
                               preferred_element_type=jnp.float32)
        sig = jax.nn.sigmoid(gates[:, :3 * H])        # one EUP slab: i, f, o
        i = sig[:, 0 * H:1 * H]
        f = sig[:, 1 * H:2 * H]
        o = sig[:, 2 * H:3 * H]
        g = jnp.tanh(gates[:, 3 * H:4 * H])
        c_new = f * c + i * g
        h_new = o * jnp.tanh(c_new)
        return h_new, c_new

    zeros_bh = jnp.zeros((B, H), jnp.float32)

    # ---------------- encoder LSTM (num_layers = 1), fully unrolled ----------
    h, c = zeros_bh, zeros_bh
    enc_list = []
    for t in range(T):
        h, c = lstm_step(xp_enc[t], h, c, ew_hh)
        enc_list.append(h)
    enc = jnp.stack(enc_list, axis=1)                 # (B, S, H), S == T

    # ---------------- decoder LSTMCell recurrence only -----------------------
    # hx = last encoder hidden state (squeeze(h_n)), cx = zeros.
    hx, cx = h, zeros_bh
    hq_list = []
    for t in range(T):
        hx, cx = lstm_step(xp_dec[t], hx, cx, dw_hh)
        hq_list.append(hx)
    hq = jnp.stack(hq_list, axis=1)                   # (B, T, H)

    # ---------------- batched attention + FC epilogue ------------------------
    # scores[b,t,s] = <hq[b,t,:], enc[b,s,:]>  -> one batched MXU matmul.
    scores = jnp.einsum('bth,bsh->bts', hq, enc,
                        preferred_element_type=jnp.float32)        # (B, T, S)
    m = jnp.max(scores, axis=-1, keepdims=True)
    e = jnp.exp(scores - m)                                         # one EUP slab
    w = e / jnp.sum(e, axis=-1, keepdims=True)                      # softmax over S

    # Fold the Linear(2H->1) context half into the attention so the (B,T,H)
    # context stack never materializes:
    #   sum_h ctx[b,t,h]*wc[h] == sum_s w[b,t,s] * (sum_h enc[b,s,h]*wc[h])
    enc_fc = jnp.sum(enc * fc_wc[:, None, :], axis=-1)              # (B, S)
    out_ctx = jnp.sum(w * enc_fc[:, None, :], axis=-1)              # (B, T)
    out_h = jnp.sum(hq * fc_wh[:, None, :], axis=-1)                # (B, T)

    out_ref[...] = out_ctx + out_h + fc_b_ref[...]                  # (B, T)


# -----------------------------------------------------------------------------
# Wrapper: parameter packing + pallas_call
# -----------------------------------------------------------------------------
def _pack_lstm(w_ih, w_hh, b_ih, b_hh):
    """Pack PyTorch LSTM params.

    Reorders the packed gates from PyTorch's i|f|g|o to sigmoid-contiguous
    i|f|o|g, returns the (1,4H) input-weight row (f32), the (H,4H) hidden
    weights W_hh.T in bf16 (MXU operands), and the (1,4H) summed-bias row.
    """
    H = w_hh.shape[0] // 4
    perm = np.concatenate([np.arange(0, 2 * H),        # i, f
                           np.arange(3 * H, 4 * H),    # o
                           np.arange(2 * H, 3 * H)])   # g
    w_ih_row = jnp.reshape(w_ih[perm], (1, -1)).astype(jnp.float32)     # (1, 4H)
    w_hh_packed = jnp.transpose(w_hh[perm]).astype(jnp.bfloat16)        # (H, 4H)
    b_row = jnp.reshape((b_ih + b_hh)[perm], (1, -1)).astype(jnp.float32)
    return w_ih_row, w_hh_packed, b_row


def encoder_decoder_attention_fc(x, params):
    """Training-branch (teacher forcing) forward. x: (B, T, 1) -> (B, T, 1)."""
    H = params["enc_w_hh"].shape[1]
    B, T, _ = x.shape

    ew_ih, ew_hh, eb = _pack_lstm(params["enc_w_ih"], params["enc_w_hh"],
                                  params["enc_b_ih"], params["enc_b_hh"])
    dw_ih, dw_hh, db = _pack_lstm(params["dec_w_ih"], params["dec_w_hh"],
                                  params["dec_b_ih"], params["dec_b_hh"])
    fc_wc = params["fc_w"][:, :H].astype(jnp.float32)                   # (1, H)
    fc_wh = params["fc_w"][:, H:].astype(jnp.float32)                   # (1, H)
    fc_b = params["fc_b"].reshape(1, 1).astype(jnp.float32)             # (1, 1)

    x_tb1 = jnp.transpose(x, (1, 0, 2)).astype(jnp.float32)             # (T, B, 1)

    vmem = pl.BlockSpec(memory_space=pltpu.MemorySpace.VMEM)
    out_bt = pl.pallas_call(
        _enc_dec_attn_kernel,
        out_shape=jax.ShapeDtypeStruct((B, T), jnp.float32),
        in_specs=[vmem] * 10,
        out_specs=vmem,
    )(x_tb1, ew_ih, eb, dw_ih, db, ew_hh, dw_hh, fc_wc, fc_wh, fc_b)

    return out_bt[:, :, None]                                           # (B, T, 1)


# -----------------------------------------------------------------------------
# Deterministic parameter init (PyTorch-style uniform(-1/sqrt(H), 1/sqrt(H)))
# -----------------------------------------------------------------------------
def init_params(key, hidden_size):
    H = hidden_size
    bound = 1.0 / np.sqrt(H)
    keys = jax.random.split(key, 10)

    def u(k, shape):
        return jax.random.uniform(k, shape, jnp.float32, -bound, bound)

    return dict(
        enc_w_ih=u(keys[0], (4 * H, 1)),
        enc_w_hh=u(keys[1], (4 * H, H)),
        enc_b_ih=u(keys[2], (4 * H,)),
        enc_b_hh=u(keys[3], (4 * H,)),
        dec_w_ih=u(keys[4], (4 * H, 1)),
        dec_w_hh=u(keys[5], (4 * H, H)),
        dec_b_ih=u(keys[6], (4 * H,)),
        dec_b_hh=u(keys[7], (4 * H,)),
        fc_w=u(keys[8], (1, 2 * H)),
        fc_b=u(keys[9], (1,)),
    )


# -----------------------------------------------------------------------------
# Pure-JAX f32 reference (mirrors the PyTorch training-branch forward exactly)
# -----------------------------------------------------------------------------
def reference_forward(x, p):
    H = p["enc_w_hh"].shape[1]
    B, T, _ = x.shape

    def cell(x_t, h, c, w_ih, w_hh, b):
        gates = x_t @ w_ih.T + h @ w_hh.T + b
        i = jax.nn.sigmoid(gates[:, 0:H])
        f = jax.nn.sigmoid(gates[:, H:2 * H])
        g = jnp.tanh(gates[:, 2 * H:3 * H])
        o = jax.nn.sigmoid(gates[:, 3 * H:4 * H])
        c = f * c + i * g
        h = o * jnp.tanh(c)
        return h, c

    h = jnp.zeros((B, H), jnp.float32)
    c = jnp.zeros((B, H), jnp.float32)
    eb = p["enc_b_ih"] + p["enc_b_hh"]
    enc_states = []
    for t in range(T):
        h, c = cell(x[:, t, :], h, c, p["enc_w_ih"], p["enc_w_hh"], eb)
        enc_states.append(h)
    enc = jnp.stack(enc_states, axis=1)                 # (B, T, H)

    hx, cx = h, jnp.zeros_like(h)
    db = p["dec_b_ih"] + p["dec_b_hh"]
    outs = []
    for t in range(T):
        hx, cx = cell(x[:, t, :], hx, cx, p["dec_w_ih"], p["dec_w_hh"], db)
        scores = jnp.sum(enc * hx[:, None, :], axis=-1)  # (B, T)
        w = jax.nn.softmax(scores, axis=1)
        ctx = jnp.sum(enc * w[:, :, None], axis=1)       # (B, H)
        upd = jnp.concatenate([ctx, hx], axis=1)
        outs.append(upd @ p["fc_w"].T + p["fc_b"])
    out = jnp.stack(outs, axis=0)                        # (T, B, 1)
    return jnp.transpose(out, (1, 0, 2))                 # (B, T, 1)


# -----------------------------------------------------------------------------
if __name__ == "__main__":
    HIDDEN = 32            # 4*H == 128 -> packed gates fill exactly one vreg lane width
    ENC_NUM_LAYERS = 1     # training branch only squeezes correctly for 1 layer
    BATCH, SEQ = 2, 8

    key = jax.random.PRNGKey(0)
    pkey, xkey = jax.random.split(key)
    params = init_params(pkey, HIDDEN)
    x = jax.random.normal(xkey, (BATCH, SEQ, 1), jnp.float32)

    # TODO(synk): eval-branch autoregressive generation (num_gen loop) is not
    # implemented; only the training-mode (teacher-forcing) forward is covered.
    out = jax.block_until_ready(encoder_decoder_attention_fc(x, params))
    ref = jax.block_until_ready(reference_forward(x, params))

    # Tolerance accounts for bf16 MXU operands in the 16-step recurrence
    # (f32 accumulation); the softmax itself uses exact division.
    np.testing.assert_allclose(np.asarray(out), np.asarray(ref), rtol=2e-2, atol=2e-2)
    assert out.shape == (BATCH, SEQ, 1)
    print("KERNEL_OK")
</pallas_src>

<mosaic_0001>
module attributes {stable_mosaic.version = 11 : i64} {
  func.func @_enc_dec_attn_kernel(%arg0: memref<8x2x1xf32, #tpu.memory_space<vmem>>, %arg1: memref<1x128xf32, #tpu.memory_space<vmem>>, %arg2: memref<1x128xf32, #tpu.memory_space<vmem>>, %arg3: memref<1x128xf32, #tpu.memory_space<vmem>>, %arg4: memref<1x128xf32, #tpu.memory_space<vmem>>, %arg5: memref<32x128xbf16, #tpu.memory_space<vmem>>, %arg6: memref<32x128xbf16, #tpu.memory_space<vmem>>, %arg7: memref<1x32xf32, #tpu.memory_space<vmem>>, %arg8: memref<1x32xf32, #tpu.memory_space<vmem>>, %arg9: memref<1x1xf32, #tpu.memory_space<vmem>>, %arg10: memref<2x8xf32, #tpu.memory_space<vmem>>) attributes {dimension_semantics = [], scalar_prefetch = 0 : i64, scratch_operands = 0 : i64, tpu.core_type = #tpu.core_type<tc>} {
    %c0 = arith.constant 0 : index
    %c0_0 = arith.constant 0 : index
    %c0_1 = arith.constant 0 : index
    %0 = vector.load %arg0[%c0, %c0_0, %c0_1] : memref<8x2x1xf32, #tpu.memory_space<vmem>>, vector<8x2x1xf32>
    %c0_2 = arith.constant 0 : index
    %c0_3 = arith.constant 0 : index
    %1 = vector.load %arg1[%c0_2, %c0_3] : memref<1x128xf32, #tpu.memory_space<vmem>>, vector<1x128xf32>
    %c0_4 = arith.constant 0 : index
    %c0_5 = arith.constant 0 : index
    %2 = vector.load %arg2[%c0_4, %c0_5] : memref<1x128xf32, #tpu.memory_space<vmem>>, vector<1x128xf32>
    %c0_6 = arith.constant 0 : index
    %c0_7 = arith.constant 0 : index
    %3 = vector.load %arg3[%c0_6, %c0_7] : memref<1x128xf32, #tpu.memory_space<vmem>>, vector<1x128xf32>
    %c0_8 = arith.constant 0 : index
    %c0_9 = arith.constant 0 : index
    %4 = vector.load %arg4[%c0_8, %c0_9] : memref<1x128xf32, #tpu.memory_space<vmem>>, vector<1x128xf32>
    %c0_10 = arith.constant 0 : index
    %c0_11 = arith.constant 0 : index
    %5 = vector.load %arg5[%c0_10, %c0_11] : memref<32x128xbf16, #tpu.memory_space<vmem>>, vector<32x128xbf16>
    %c0_12 = arith.constant 0 : index
    %c0_13 = arith.constant 0 : index
    %6 = vector.load %arg6[%c0_12, %c0_13] : memref<32x128xbf16, #tpu.memory_space<vmem>>, vector<32x128xbf16>
    %c0_14 = arith.constant 0 : index
    %c0_15 = arith.constant 0 : index
    %7 = vector.load %arg7[%c0_14, %c0_15] : memref<1x32xf32, #tpu.memory_space<vmem>>, vector<1x32xf32>
    %c0_16 = arith.constant 0 : index
    %c0_17 = arith.constant 0 : index
    %8 = vector.load %arg8[%c0_16, %c0_17] : memref<1x32xf32, #tpu.memory_space<vmem>>, vector<1x32xf32>
    %9 = vector.shape_cast %1 : vector<1x128xf32> to vector<1x1x128xf32>
    %10 = vector.broadcast %0 : vector<8x2x1xf32> to vector<8x2x128xf32>
    %11 = vector.broadcast %9 : vector<1x1x128xf32> to vector<8x2x128xf32>
    %12 = arith.mulf %10, %11 : vector<8x2x128xf32>
    %13 = vector.shape_cast %2 : vector<1x128xf32> to vector<1x1x128xf32>
    %14 = vector.broadcast %13 : vector<1x1x128xf32> to vector<8x2x128xf32>
    %15 = arith.addf %12, %14 : vector<8x2x128xf32>
    %16 = vector.shape_cast %3 : vector<1x128xf32> to vector<1x1x128xf32>
    %17 = vector.broadcast %0 : vector<8x2x1xf32> to vector<8x2x128xf32>
    %18 = vector.broadcast %16 : vector<1x1x128xf32> to vector<8x2x128xf32>
    %19 = arith.mulf %17, %18 : vector<8x2x128xf32>
    %20 = vector.shape_cast %4 : vector<1x128xf32> to vector<1x1x128xf32>
    %21 = vector.broadcast %20 : vector<1x1x128xf32> to vector<8x2x128xf32>
    %22 = arith.addf %19, %21 : vector<8x2x128xf32>
    %cst = arith.constant 0.000000e+00 : f32
    %23 = vector.broadcast %cst : f32 to vector<2x32xf32>
    %24 = vector.extract_strided_slice %15 {offsets = [0, 0, 0], sizes = [1, 2, 128], strides = [1, 1, 1]} : vector<8x2x128xf32> to vector<1x2x128xf32>
    %25 = vector.shape_cast %24 : vector<1x2x128xf32> to vector<2x128xf32>
    %26 = arith.truncf %23 : vector<2x32xf32> to vector<2x32xbf16>
    %cst_18 = arith.constant dense<0.000000e+00> : vector<2x128xf32>
    %27 = tpu.matmul %26, %5, %cst_18 {dimension_numbers = #tpu.dot_dimension_numbers<[1], [0], [0], [1], [0, 0, 1, 1], [], []>} : vector<2x32xbf16>, vector<32x128xbf16>, vector<2x128xf32> -> vector<2x128xf32>
    %28 = arith.addf %25, %27 : vector<2x128xf32>
    %29 = vector.extract_strided_slice %28 {offsets = [0, 0], sizes = [2, 96], strides = [1, 1]} : vector<2x128xf32> to vector<2x96xf32>
    %30 = arith.negf %29 : vector<2x96xf32>
    %31 = math.exp %30 : vector<2x96xf32>
    %cst_19 = arith.constant 1.000000e+00 : f32
    %32 = vector.broadcast %cst_19 : f32 to vector<2x96xf32>
    %33 = arith.addf %32, %31 : vector<2x96xf32>
    %34 = arith.divf %32, %33 : vector<2x96xf32>
    %35 = vector.extract_strided_slice %34 {offsets = [0, 0], sizes = [2, 32], strides = [1, 1]} : vector<2x96xf32> to vector<2x32xf32>
    %36 = vector.extract_strided_slice %34 {offsets = [0, 32], sizes = [2, 32], strides = [1, 1]} : vector<2x96xf32> to vector<2x32xf32>
    %37 = vector.extract_strided_slice %34 {offsets = [0, 64], sizes = [2, 32], strides = [1, 1]} : vector<2x96xf32> to vector<2x32xf32>
    %38 = vector.extract_strided_slice %28 {offsets = [0, 96], sizes = [2, 32], strides = [1, 1]} : vector<2x128xf32> to vector<2x32xf32>
    %39 = math.tanh %38 : vector<2x32xf32>
    %40 = arith.mulf %36, %23 : vector<2x32xf32>
    %41 = arith.mulf %35, %39 : vector<2x32xf32>
    %42 = arith.addf %40, %41 : vector<2x32xf32>
    %43 = math.tanh %42 : vector<2x32xf32>
    %44 = arith.mulf %37, %43 : vector<2x32xf32>
    %45 = vector.extract_strided_slice %15 {offsets = [1, 0, 0], sizes = [1, 2, 128], strides = [1, 1, 1]} : vector<8x2x128xf32> to vector<1x2x128xf32>
    %46 = vector.shape_cast %45 : vector<1x2x128xf32> to vector<2x128xf32>
    %47 = arith.truncf %44 : vector<2x32xf32> to vector<2x32xbf16>
    %cst_20 = arith.constant dense<0.000000e+00> : vector<2x128xf32>
    %48 = tpu.matmul %47, %5, %cst_20 {dimension_numbers = #tpu.dot_dimension_numbers<[1], [0], [0], [1], [0, 0, 1, 1], [], []>} : vector<2x32xbf16>, vector<32x128xbf16>, vector<2x128xf32> -> vector<2x128xf32>
    %49 = arith.addf %46, %48 : vector<2x128xf32>
    %50 = vector.extract_strided_slice %49 {offsets = [0, 0], sizes = [2, 96], strides = [1, 1]} : vector<2x128xf32> to vector<2x96xf32>
    %51 = arith.negf %50 : vector<2x96xf32>
    %52 = math.exp %51 : vector<2x96xf32>
    %cst_21 = arith.constant 1.000000e+00 : f32
    %53 = vector.broadcast %cst_21 : f32 to vector<2x96xf32>
    %54 = arith.addf %53, %52 : vector<2x96xf32>
    %55 = arith.divf %53, %54 : vector<2x96xf32>
    %56 = vector.extract_strided_slice %55 {offsets = [0, 0], sizes = [2, 32], strides = [1, 1]} : vector<2x96xf32> to vector<2x32xf32>
    %57 = vector.extract_strided_slice %55 {offsets = [0, 32], sizes = [2, 32], strides = [1, 1]} : vector<2x96xf32> to vector<2x32xf32>
    %58 = vector.extract_strided_slice %55 {offsets = [0, 64], sizes = [2, 32], strides = [1, 1]} : vector<2x96xf32> to vector<2x32xf32>
    %59 = vector.extract_strided_slice %49 {offsets = [0, 96], sizes = [2, 32], strides = [1, 1]} : vector<2x128xf32> to vector<2x32xf32>
    %60 = math.tanh %59 : vector<2x32xf32>
    %61 = arith.mulf %57, %42 : vector<2x32xf32>
    %62 = arith.mulf %56, %60 : vector<2x32xf32>
    %63 = arith.addf %61, %62 : vector<2x32xf32>
    %64 = math.tanh %63 : vector<2x32xf32>
    %65 = arith.mulf %58, %64 : vector<2x32xf32>
    %66 = vector.extract_strided_slice %15 {offsets = [2, 0, 0], sizes = [1, 2, 128], strides = [1, 1, 1]} : vector<8x2x128xf32> to vector<1x2x128xf32>
    %67 = vector.shape_cast %66 : vector<1x2x128xf32> to vector<2x128xf32>
    %68 = arith.truncf %65 : vector<2x32xf32> to vector<2x32xbf16>
    %cst_22 = arith.constant dense<0.000000e+00> : vector<2x128xf32>
    %69 = tpu.matmul %68, %5, %cst_22 {dimension_numbers = #tpu.dot_dimension_numbers<[1], [0], [0], [1], [0, 0, 1, 1], [], []>} : vector<2x32xbf16>, vector<32x128xbf16>, vector<2x128xf32> -> vector<2x128xf32>
    %70 = arith.addf %67, %69 : vector<2x128xf32>
    %71 = vector.extract_strided_slice %70 {offsets = [0, 0], sizes = [2, 96], strides = [1, 1]} : vector<2x128xf32> to vector<2x96xf32>
    %72 = arith.negf %71 : vector<2x96xf32>
    %73 = math.exp %72 : vector<2x96xf32>
    %cst_23 = arith.constant 1.000000e+00 : f32
    %74 = vector.broadcast %cst_23 : f32 to vector<2x96xf32>
    %75 = arith.addf %74, %73 : vector<2x96xf32>
    %76 = arith.divf %74, %75 : vector<2x96xf32>
    %77 = vector.extract_strided_slice %76 {offsets = [0, 0], sizes = [2, 32], strides = [1, 1]} : vector<2x96xf32> to vector<2x32xf32>
    %78 = vector.extract_strided_slice %76 {offsets = [0, 32], sizes = [2, 32], strides = [1, 1]} : vector<2x96xf32> to vector<2x32xf32>
    %79 = vector.extract_strided_slice %76 {offsets = [0, 64], sizes = [2, 32], strides = [1, 1]} : vector<2x96xf32> to vector<2x32xf32>
    %80 = vector.extract_strided_slice %70 {offsets = [0, 96], sizes = [2, 32], strides = [1, 1]} : vector<2x128xf32> to vector<2x32xf32>
    %81 = math.tanh %80 : vector<2x32xf32>
    %82 = arith.mulf %78, %63 : vector<2x32xf32>
    %83 = arith.mulf %77, %81 : vector<2x32xf32>
    %84 = arith.addf %82, %83 : vector<2x32xf32>
    %85 = math.tanh %84 : vector<2x32xf32>
    %86 = arith.mulf %79, %85 : vector<2x32xf32>
    %87 = vector.extract_strided_slice %15 {offsets = [3, 0, 0], sizes = [1, 2, 128], strides = [1, 1, 1]} : vector<8x2x128xf32> to vector<1x2x128xf32>
    %88 = vector.shape_cast %87 : vector<1x2x128xf32> to vector<2x128xf32>
    %89 = arith.truncf %86 : vector<2x32xf32> to vector<2x32xbf16>
    %cst_24 = arith.constant dense<0.000000e+00> : vector<2x128xf32>
    %90 = tpu.matmul %89, %5, %cst_24 {dimension_numbers = #tpu.dot_dimension_numbers<[1], [0], [0], [1], [0, 0, 1, 1], [], []>} : vector<2x32xbf16>, vector<32x128xbf16>, vector<2x128xf32> -> vector<2x128xf32>
    %91 = arith.addf %88, %90 : vector<2x128xf32>
    %92 = vector.extract_strided_slice %91 {offsets = [0, 0], sizes = [2, 96], strides = [1, 1]} : vector<2x128xf32> to vector<2x96xf32>
    %93 = arith.negf %92 : vector<2x96xf32>
    %94 = math.exp %93 : vector<2x96xf32>
    %cst_25 = arith.constant 1.000000e+00 : f32
    %95 = vector.broadcast %cst_25 : f32 to vector<2x96xf32>
    %96 = arith.addf %95, %94 : vector<2x96xf32>
    %97 = arith.divf %95, %96 : vector<2x96xf32>
    %98 = vector.extract_strided_slice %97 {offsets = [0, 0], sizes = [2, 32], strides = [1, 1]} : vector<2x96xf32> to vector<2x32xf32>
    %99 = vector.extract_strided_slice %97 {offsets = [0, 32], sizes = [2, 32], strides = [1, 1]} : vector<2x96xf32> to vector<2x32xf32>
    %100 = vector.extract_strided_slice %97 {offsets = [0, 64], sizes = [2, 32], strides = [1, 1]} : vector<2x96xf32> to vector<2x32xf32>
    %101 = vector.extract_strided_slice %91 {offsets = [0, 96], sizes = [2, 32], strides = [1, 1]} : vector<2x128xf32> to vector<2x32xf32>
    %102 = math.tanh %101 : vector<2x32xf32>
    %103 = arith.mulf %99, %84 : vector<2x32xf32>
    %104 = arith.mulf %98, %102 : vector<2x32xf32>
    %105 = arith.addf %103, %104 : vector<2x32xf32>
    %106 = math.tanh %105 : vector<2x32xf32>
    %107 = arith.mulf %100, %106 : vector<2x32xf32>
    %108 = vector.extract_strided_slice %15 {offsets = [4, 0, 0], sizes = [1, 2, 128], strides = [1, 1, 1]} : vector<8x2x128xf32> to vector<1x2x128xf32>
    %109 = vector.shape_cast %108 : vector<1x2x128xf32> to vector<2x128xf32>
    %110 = arith.truncf %107 : vector<2x32xf32> to vector<2x32xbf16>
    %cst_26 = arith.constant dense<0.000000e+00> : vector<2x128xf32>
    %111 = tpu.matmul %110, %5, %cst_26 {dimension_numbers = #tpu.dot_dimension_numbers<[1], [0], [0], [1], [0, 0, 1, 1], [], []>} : vector<2x32xbf16>, vector<32x128xbf16>, vector<2x128xf32> -> vector<2x128xf32>
    %112 = arith.addf %109, %111 : vector<2x128xf32>
    %113 = vector.extract_strided_slice %112 {offsets = [0, 0], sizes = [2, 96], strides = [1, 1]} : vector<2x128xf32> to vector<2x96xf32>
    %114 = arith.negf %113 : vector<2x96xf32>
    %115 = math.exp %114 : vector<2x96xf32>
    %cst_27 = arith.constant 1.000000e+00 : f32
    %116 = vector.broadcast %cst_27 : f32 to vector<2x96xf32>
    %117 = arith.addf %116, %115 : vector<2x96xf32>
    %118 = arith.divf %116, %117 : vector<2x96xf32>
    %119 = vector.extract_strided_slice %118 {offsets = [0, 0], sizes = [2, 32], strides = [1, 1]} : vector<2x96xf32> to vector<2x32xf32>
    %120 = vector.extract_strided_slice %118 {offsets = [0, 32], sizes = [2, 32], strides = [1, 1]} : vector<2x96xf32> to vector<2x32xf32>
    %121 = vector.extract_strided_slice %118 {offsets = [0, 64], sizes = [2, 32], strides = [1, 1]} : vector<2x96xf32> to vector<2x32xf32>
    %122 = vector.extract_strided_slice %112 {offsets = [0, 96], sizes = [2, 32], strides = [1, 1]} : vector<2x128xf32> to vector<2x32xf32>
    %123 = math.tanh %122 : vector<2x32xf32>
    %124 = arith.mulf %120, %105 : vector<2x32xf32>
    %125 = arith.mulf %119, %123 : vector<2x32xf32>
    %126 = arith.addf %124, %125 : vector<2x32xf32>
    %127 = math.tanh %126 : vector<2x32xf32>
    %128 = arith.mulf %121, %127 : vector<2x32xf32>
    %129 = vector.extract_strided_slice %15 {offsets = [5, 0, 0], sizes = [1, 2, 128], strides = [1, 1, 1]} : vector<8x2x128xf32> to vector<1x2x128xf32>
    %130 = vector.shape_cast %129 : vector<1x2x128xf32> to vector<2x128xf32>
    %131 = arith.truncf %128 : vector<2x32xf32> to vector<2x32xbf16>
    %cst_28 = arith.constant dense<0.000000e+00> : vector<2x128xf32>
    %132 = tpu.matmul %131, %5, %cst_28 {dimension_numbers = #tpu.dot_dimension_numbers<[1], [0], [0], [1], [0, 0, 1, 1], [], []>} : vector<2x32xbf16>, vector<32x128xbf16>, vector<2x128xf32> -> vector<2x128xf32>
    %133 = arith.addf %130, %132 : vector<2x128xf32>
    %134 = vector.extract_strided_slice %133 {offsets = [0, 0], sizes = [2, 96], strides = [1, 1]} : vector<2x128xf32> to vector<2x96xf32>
    %135 = arith.negf %134 : vector<2x96xf32>
    %136 = math.exp %135 : vector<2x96xf32>
    %cst_29 = arith.constant 1.000000e+00 : f32
    %137 = vector.broadcast %cst_29 : f32 to vector<2x96xf32>
    %138 = arith.addf %137, %136 : vector<2x96xf32>
    %139 = arith.divf %137, %138 : vector<2x96xf32>
    %140 = vector.extract_strided_slice %139 {offsets = [0, 0], sizes = [2, 32], strides = [1, 1]} : vector<2x96xf32> to vector<2x32xf32>
    %141 = vector.extract_strided_slice %139 {offsets = [0, 32], sizes = [2, 32], strides = [1, 1]} : vector<2x96xf32> to vector<2x32xf32>
    %142 = vector.extract_strided_slice %139 {offsets = [0, 64], sizes = [2, 32], strides = [1, 1]} : vector<2x96xf32> to vector<2x32xf32>
    %143 = vector.extract_strided_slice %133 {offsets = [0, 96], sizes = [2, 32], strides = [1, 1]} : vector<2x128xf32> to vector<2x32xf32>
    %144 = math.tanh %143 : vector<2x32xf32>
    %145 = arith.mulf %141, %126 : vector<2x32xf32>
    %146 = arith.mulf %140, %144 : vector<2x32xf32>
    %147 = arith.addf %145, %146 : vector<2x32xf32>
    %148 = math.tanh %147 : vector<2x32xf32>
    %149 = arith.mulf %142, %148 : vector<2x32xf32>
    %150 = vector.extract_strided_slice %15 {offsets = [6, 0, 0], sizes = [1, 2, 128], strides = [1, 1, 1]} : vector<8x2x128xf32> to vector<1x2x128xf32>
    %151 = vector.shape_cast %150 : vector<1x2x128xf32> to vector<2x128xf32>
    %152 = arith.truncf %149 : vector<2x32xf32> to vector<2x32xbf16>
    %cst_30 = arith.constant dense<0.000000e+00> : vector<2x128xf32>
    %153 = tpu.matmul %152, %5, %cst_30 {dimension_numbers = #tpu.dot_dimension_numbers<[1], [0], [0], [1], [0, 0, 1, 1], [], []>} : vector<2x32xbf16>, vector<32x128xbf16>, vector<2x128xf32> -> vector<2x128xf32>
    %154 = arith.addf %151, %153 : vector<2x128xf32>
    %155 = vector.extract_strided_slice %154 {offsets = [0, 0], sizes = [2, 96], strides = [1, 1]} : vector<2x128xf32> to vector<2x96xf32>
    %156 = arith.negf %155 : vector<2x96xf32>
    %157 = math.exp %156 : vector<2x96xf32>
    %cst_31 = arith.constant 1.000000e+00 : f32
    %158 = vector.broadcast %cst_31 : f32 to vector<2x96xf32>
    %159 = arith.addf %158, %157 : vector<2x96xf32>
    %160 = arith.divf %158, %159 : vector<2x96xf32>
    %161 = vector.extract_strided_slice %160 {offsets = [0, 0], sizes = [2, 32], strides = [1, 1]} : vector<2x96xf32> to vector<2x32xf32>
    %162 = vector.extract_strided_slice %160 {offsets = [0, 32], sizes = [2, 32], strides = [1, 1]} : vector<2x96xf32> to vector<2x32xf32>
    %163 = vector.extract_strided_slice %160 {offsets = [0, 64], sizes = [2, 32], strides = [1, 1]} : vector<2x96xf32> to vector<2x32xf32>
    %164 = vector.extract_strided_slice %154 {offsets = [0, 96], sizes = [2, 32], strides = [1, 1]} : vector<2x128xf32> to vector<2x32xf32>
    %165 = math.tanh %164 : vector<2x32xf32>
    %166 = arith.mulf %162, %147 : vector<2x32xf32>
    %167 = arith.mulf %161, %165 : vector<2x32xf32>
    %168 = arith.addf %166, %167 : vector<2x32xf32>
    %169 = math.tanh %168 : vector<2x32xf32>
    %170 = arith.mulf %163, %169 : vector<2x32xf32>
    %171 = vector.extract_strided_slice %15 {offsets = [7, 0, 0], sizes = [1, 2, 128], strides = [1, 1, 1]} : vector<8x2x128xf32> to vector<1x2x128xf32>
    %172 = vector.shape_cast %171 : vector<1x2x128xf32> to vector<2x128xf32>
    %173 = arith.truncf %170 : vector<2x32xf32> to vector<2x32xbf16>
    %cst_32 = arith.constant dense<0.000000e+00> : vector<2x128xf32>
    %174 = tpu.matmul %173, %5, %cst_32 {dimension_numbers = #tpu.dot_dimension_numbers<[1], [0], [0], [1], [0, 0, 1, 1], [], []>} : vector<2x32xbf16>, vector<32x128xbf16>, vector<2x128xf32> -> vector<2x128xf32>
    %175 = arith.addf %172, %174 : vector<2x128xf32>
    %176 = vector.extract_strided_slice %175 {offsets = [0, 0], sizes = [2, 96], strides = [1, 1]} : vector<2x128xf32> to vector<2x96xf32>
    %177 = arith.negf %176 : vector<2x96xf32>
    %178 = math.exp %177 : vector<2x96xf32>
    %cst_33 = arith.constant 1.000000e+00 : f32
    %179 = vector.broadcast %cst_33 : f32 to vector<2x96xf32>
    %180 = arith.addf %179, %178 : vector<2x96xf32>
    %181 = arith.divf %179, %180 : vector<2x96xf32>
    %182 = vector.extract_strided_slice %181 {offsets = [0, 0], sizes = [2, 32], strides = [1, 1]} : vector<2x96xf32> to vector<2x32xf32>
    %183 = vector.extract_strided_slice %181 {offsets = [0, 32], sizes = [2, 32], strides = [1, 1]} : vector<2x96xf32> to vector<2x32xf32>
    %184 = vector.extract_strided_slice %181 {offsets = [0, 64], sizes = [2, 32], strides = [1, 1]} : vector<2x96xf32> to vector<2x32xf32>
    %185 = vector.extract_strided_slice %175 {offsets = [0, 96], sizes = [2, 32], strides = [1, 1]} : vector<2x128xf32> to vector<2x32xf32>
    %186 = math.tanh %185 : vector<2x32xf32>
    %187 = arith.mulf %183, %168 : vector<2x32xf32>
    %188 = arith.mulf %182, %186 : vector<2x32xf32>
    %189 = arith.addf %187, %188 : vector<2x32xf32>
    %190 = math.tanh %189 : vector<2x32xf32>
    %191 = arith.mulf %184, %190 : vector<2x32xf32>
    %192 = vector.shape_cast %44 : vector<2x32xf32> to vector<2x1x32xf32>
    %193 = vector.shape_cast %65 : vector<2x32xf32> to vector<2x1x32xf32>
    %194 = vector.shape_cast %86 : vector<2x32xf32> to vector<2x1x32xf32>
    %195 = vector.shape_cast %107 : vector<2x32xf32> to vector<2x1x32xf32>
    %196 = vector.shape_cast %128 : vector<2x32xf32> to vector<2x1x32xf32>
    %197 = vector.shape_cast %149 : vector<2x32xf32> to vector<2x1x32xf32>
    %198 = vector.shape_cast %170 : vector<2x32xf32> to vector<2x1x32xf32>
    %199 = vector.shape_cast %191 : vector<2x32xf32> to vector<2x1x32xf32>
    %200 = tpu.concatenate %192, %193, %194, %195, %196, %197, %198, %199 in 1 : vector<2x1x32xf32>, vector<2x1x32xf32>, vector<2x1x32xf32>, vector<2x1x32xf32>, vector<2x1x32xf32>, vector<2x1x32xf32>, vector<2x1x32xf32>, vector<2x1x32xf32> -> vector<2x8x32xf32>
    %201 = vector.extract_strided_slice %22 {offsets = [0, 0, 0], sizes = [1, 2, 128], strides = [1, 1, 1]} : vector<8x2x128xf32> to vector<1x2x128xf32>
    %202 = vector.shape_cast %201 : vector<1x2x128xf32> to vector<2x128xf32>
    %203 = arith.truncf %191 : vector<2x32xf32> to vector<2x32xbf16>
    %cst_34 = arith.constant dense<0.000000e+00> : vector<2x128xf32>
    %204 = tpu.matmul %203, %6, %cst_34 {dimension_numbers = #tpu.dot_dimension_numbers<[1], [0], [0], [1], [0, 0, 1, 1], [], []>} : vector<2x32xbf16>, vector<32x128xbf16>, vector<2x128xf32> -> vector<2x128xf32>
    %205 = arith.addf %202, %204 : vector<2x128xf32>
    %206 = vector.extract_strided_slice %205 {offsets = [0, 0], sizes = [2, 96], strides = [1, 1]} : vector<2x128xf32> to vector<2x96xf32>
    %207 = arith.negf %206 : vector<2x96xf32>
    %208 = math.exp %207 : vector<2x96xf32>
    %cst_35 = arith.constant 1.000000e+00 : f32
    %209 = vector.broadcast %cst_35 : f32 to vector<2x96xf32>
    %210 = arith.addf %209, %208 : vector<2x96xf32>
    %211 = arith.divf %209, %210 : vector<2x96xf32>
    %212 = vector.extract_strided_slice %211 {offsets = [0, 0], sizes = [2, 32], strides = [1, 1]} : vector<2x96xf32> to vector<2x32xf32>
    %213 = vector.extract_strided_slice %211 {offsets = [0, 32], sizes = [2, 32], strides = [1, 1]} : vector<2x96xf32> to vector<2x32xf32>
    %214 = vector.extract_strided_slice %211 {offsets = [0, 64], sizes = [2, 32], strides = [1, 1]} : vector<2x96xf32> to vector<2x32xf32>
    %215 = vector.extract_strided_slice %205 {offsets = [0, 96], sizes = [2, 32], strides = [1, 1]} : vector<2x128xf32> to vector<2x32xf32>
    %216 = math.tanh %215 : vector<2x32xf32>
    %217 = arith.mulf %213, %23 : vector<2x32xf32>
    %218 = arith.mulf %212, %216 : vector<2x32xf32>
    %219 = arith.addf %217, %218 : vector<2x32xf32>
    %220 = math.tanh %219 : vector<2x32xf32>
    %221 = arith.mulf %214, %220 : vector<2x32xf32>
    %222 = vector.extract_strided_slice %22 {offsets = [1, 0, 0], sizes = [1, 2, 128], strides = [1, 1, 1]} : vector<8x2x128xf32> to vector<1x2x128xf32>
    %223 = vector.shape_cast %222 : vector<1x2x128xf32> to vector<2x128xf32>
    %224 = arith.truncf %221 : vector<2x32xf32> to vector<2x32xbf16>
    %cst_36 = arith.constant dense<0.000000e+00> : vector<2x128xf32>
    %225 = tpu.matmul %224, %6, %cst_36 {dimension_numbers = #tpu.dot_dimension_numbers<[1], [0], [0], [1], [0, 0, 1, 1], [], []>} : vector<2x32xbf16>, vector<32x128xbf16>, vector<2x128xf32> -> vector<2x128xf32>
    %226 = arith.addf %223, %225 : vector<2x128xf32>
    %227 = vector.extract_strided_slice %226 {offsets = [0, 0], sizes = [2, 96], strides = [1, 1]} : vector<2x128xf32> to vector<2x96xf32>
    %228 = arith.negf %227 : vector<2x96xf32>
    %229 = math.exp %228 : vector<2x96xf32>
    %cst_37 = arith.constant 1.000000e+00 : f32
    %230 = vector.broadcast %cst_37 : f32 to vector<2x96xf32>
    %231 = arith.addf %230, %229 : vector<2x96xf32>
    %232 = arith.divf %230, %231 : vector<2x96xf32>
    %233 = vector.extract_strided_slice %232 {offsets = [0, 0], sizes = [2, 32], strides = [1, 1]} : vector<2x96xf32> to vector<2x32xf32>
    %234 = vector.extract_strided_slice %232 {offsets = [0, 32], sizes = [2, 32], strides = [1, 1]} : vector<2x96xf32> to vector<2x32xf32>
    %235 = vector.extract_strided_slice %232 {offsets = [0, 64], sizes = [2, 32], strides = [1, 1]} : vector<2x96xf32> to vector<2x32xf32>
    %236 = vector.extract_strided_slice %226 {offsets = [0, 96], sizes = [2, 32], strides = [1, 1]} : vector<2x128xf32> to vector<2x32xf32>
    %237 = math.tanh %236 : vector<2x32xf32>
    %238 = arith.mulf %234, %219 : vector<2x32xf32>
    %239 = arith.mulf %233, %237 : vector<2x32xf32>
    %240 = arith.addf %238, %239 : vector<2x32xf32>
    %241 = math.tanh %240 : vector<2x32xf32>
    %242 = arith.mulf %235, %241 : vector<2x32xf32>
    %243 = vector.extract_strided_slice %22 {offsets = [2, 0, 0], sizes = [1, 2, 128], strides = [1, 1, 1]} : vector<8x2x128xf32> to vector<1x2x128xf32>
    %244 = vector.shape_cast %243 : vector<1x2x128xf32> to vector<2x128xf32>
    %245 = arith.truncf %242 : vector<2x32xf32> to vector<2x32xbf16>
    %cst_38 = arith.constant dense<0.000000e+00> : vector<2x128xf32>
    %246 = tpu.matmul %245, %6, %cst_38 {dimension_numbers = #tpu.dot_dimension_numbers<[1], [0], [0], [1], [0, 0, 1, 1], [], []>} : vector<2x32xbf16>, vector<32x128xbf16>, vector<2x128xf32> -> vector<2x128xf32>
    %247 = arith.addf %244, %246 : vector<2x128xf32>
    %248 = vector.extract_strided_slice %247 {offsets = [0, 0], sizes = [2, 96], strides = [1, 1]} : vector<2x128xf32> to vector<2x96xf32>
    %249 = arith.negf %248 : vector<2x96xf32>
    %250 = math.exp %249 : vector<2x96xf32>
    %cst_39 = arith.constant 1.000000e+00 : f32
    %251 = vector.broadcast %cst_39 : f32 to vector<2x96xf32>
    %252 = arith.addf %251, %250 : vector<2x96xf32>
    %253 = arith.divf %251, %252 : vector<2x96xf32>
    %254 = vector.extract_strided_slice %253 {offsets = [0, 0], sizes = [2, 32], strides = [1, 1]} : vector<2x96xf32> to vector<2x32xf32>
    %255 = vector.extract_strided_slice %253 {offsets = [0, 32], sizes = [2, 32], strides = [1, 1]} : vector<2x96xf32> to vector<2x32xf32>
    %256 = vector.extract_strided_slice %253 {offsets = [0, 64], sizes = [2, 32], strides = [1, 1]} : vector<2x96xf32> to vector<2x32xf32>
    %257 = vector.extract_strided_slice %247 {offsets = [0, 96], sizes = [2, 32], strides = [1, 1]} : vector<2x128xf32> to vector<2x32xf32>
    %258 = math.tanh %257 : vector<2x32xf32>
    %259 = arith.mulf %255, %240 : vector<2x32xf32>
    %260 = arith.mulf %254, %258 : vector<2x32xf32>
    %261 = arith.addf %259, %260 : vector<2x32xf32>
    %262 = math.tanh %261 : vector<2x32xf32>
    %263 = arith.mulf %256, %262 : vector<2x32xf32>
    %264 = vector.extract_strided_slice %22 {offsets = [3, 0, 0], sizes = [1, 2, 128], strides = [1, 1, 1]} : vector<8x2x128xf32> to vector<1x2x128xf32>
    %265 = vector.shape_cast %264 : vector<1x2x128xf32> to vector<2x128xf32>
    %266 = arith.truncf %263 : vector<2x32xf32> to vector<2x32xbf16>
    %cst_40 = arith.constant dense<0.000000e+00> : vector<2x128xf32>
    %267 = tpu.matmul %266, %6, %cst_40 {dimension_numbers = #tpu.dot_dimension_numbers<[1], [0], [0], [1], [0, 0, 1, 1], [], []>} : vector<2x32xbf16>, vector<32x128xbf16>, vector<2x128xf32> -> vector<2x128xf32>
    %268 = arith.addf %265, %267 : vector<2x128xf32>
    %269 = vector.extract_strided_slice %268 {offsets = [0, 0], sizes = [2, 96], strides = [1, 1]} : vector<2x128xf32> to vector<2x96xf32>
    %270 = arith.negf %269 : vector<2x96xf32>
    %271 = math.exp %270 : vector<2x96xf32>
    %cst_41 = arith.constant 1.000000e+00 : f32
    %272 = vector.broadcast %cst_41 : f32 to vector<2x96xf32>
    %273 = arith.addf %272, %271 : vector<2x96xf32>
    %274 = arith.divf %272, %273 : vector<2x96xf32>
    %275 = vector.extract_strided_slice %274 {offsets = [0, 0], sizes = [2, 32], strides = [1, 1]} : vector<2x96xf32> to vector<2x32xf32>
    %276 = vector.extract_strided_slice %274 {offsets = [0, 32], sizes = [2, 32], strides = [1, 1]} : vector<2x96xf32> to vector<2x32xf32>
    %277 = vector.extract_strided_slice %274 {offsets = [0, 64], sizes = [2, 32], strides = [1, 1]} : vector<2x96xf32> to vector<2x32xf32>
    %278 = vector.extract_strided_slice %268 {offsets = [0, 96], sizes = [2, 32], strides = [1, 1]} : vector<2x128xf32> to vector<2x32xf32>
    %279 = math.tanh %278 : vector<2x32xf32>
    %280 = arith.mulf %276, %261 : vector<2x32xf32>
    %281 = arith.mulf %275, %279 : vector<2x32xf32>
    %282 = arith.addf %280, %281 : vector<2x32xf32>
    %283 = math.tanh %282 : vector<2x32xf32>
    %284 = arith.mulf %277, %283 : vector<2x32xf32>
    %285 = vector.extract_strided_slice %22 {offsets = [4, 0, 0], sizes = [1, 2, 128], strides = [1, 1, 1]} : vector<8x2x128xf32> to vector<1x2x128xf32>
    %286 = vector.shape_cast %285 : vector<1x2x128xf32> to vector<2x128xf32>
    %287 = arith.truncf %284 : vector<2x32xf32> to vector<2x32xbf16>
    %cst_42 = arith.constant dense<0.000000e+00> : vector<2x128xf32>
    %288 = tpu.matmul %287, %6, %cst_42 {dimension_numbers = #tpu.dot_dimension_numbers<[1], [0], [0], [1], [0, 0, 1, 1], [], []>} : vector<2x32xbf16>, vector<32x128xbf16>, vector<2x128xf32> -> vector<2x128xf32>
    %289 = arith.addf %286, %288 : vector<2x128xf32>
    %290 = vector.extract_strided_slice %289 {offsets = [0, 0], sizes = [2, 96], strides = [1, 1]} : vector<2x128xf32> to vector<2x96xf32>
    %291 = arith.negf %290 : vector<2x96xf32>
    %292 = math.exp %291 : vector<2x96xf32>
    %cst_43 = arith.constant 1.000000e+00 : f32
    %293 = vector.broadcast %cst_43 : f32 to vector<2x96xf32>
    %294 = arith.addf %293, %292 : vector<2x96xf32>
    %295 = arith.divf %293, %294 : vector<2x96xf32>
    %296 = vector.extract_strided_slice %295 {offsets = [0, 0], sizes = [2, 32], strides = [1, 1]} : vector<2x96xf32> to vector<2x32xf32>
    %297 = vector.extract_strided_slice %295 {offsets = [0, 32], sizes = [2, 32], strides = [1, 1]} : vector<2x96xf32> to vector<2x32xf32>
    %298 = vector.extract_strided_slice %295 {offsets = [0, 64], sizes = [2, 32], strides = [1, 1]} : vector<2x96xf32> to vector<2x32xf32>
    %299 = vector.extract_strided_slice %289 {offsets = [0, 96], sizes = [2, 32], strides = [1, 1]} : vector<2x128xf32> to vector<2x32xf32>
    %300 = math.tanh %299 : vector<2x32xf32>
    %301 = arith.mulf %297, %282 : vector<2x32xf32>
    %302 = arith.mulf %296, %300 : vector<2x32xf32>
    %303 = arith.addf %301, %302 : vector<2x32xf32>
    %304 = math.tanh %303 : vector<2x32xf32>
    %305 = arith.mulf %298, %304 : vector<2x32xf32>
    %306 = vector.extract_strided_slice %22 {offsets = [5, 0, 0], sizes = [1, 2, 128], strides = [1, 1, 1]} : vector<8x2x128xf32> to vector<1x2x128xf32>
    %307 = vector.shape_cast %306 : vector<1x2x128xf32> to vector<2x128xf32>
    %308 = arith.truncf %305 : vector<2x32xf32> to vector<2x32xbf16>
    %cst_44 = arith.constant dense<0.000000e+00> : vector<2x128xf32>
    %309 = tpu.matmul %308, %6, %cst_44 {dimension_numbers = #tpu.dot_dimension_numbers<[1], [0], [0], [1], [0, 0, 1, 1], [], []>} : vector<2x32xbf16>, vector<32x128xbf16>, vector<2x128xf32> -> vector<2x128xf32>
    %310 = arith.addf %307, %309 : vector<2x128xf32>
    %311 = vector.extract_strided_slice %310 {offsets = [0, 0], sizes = [2, 96], strides = [1, 1]} : vector<2x128xf32> to vector<2x96xf32>
    %312 = arith.negf %311 : vector<2x96xf32>
    %313 = math.exp %312 : vector<2x96xf32>
    %cst_45 = arith.constant 1.000000e+00 : f32
    %314 = vector.broadcast %cst_45 : f32 to vector<2x96xf32>
    %315 = arith.addf %314, %313 : vector<2x96xf32>
    %316 = arith.divf %314, %315 : vector<2x96xf32>
    %317 = vector.extract_strided_slice %316 {offsets = [0, 0], sizes = [2, 32], strides = [1, 1]} : vector<2x96xf32> to vector<2x32xf32>
    %318 = vector.extract_strided_slice %316 {offsets = [0, 32], sizes = [2, 32], strides = [1, 1]} : vector<2x96xf32> to vector<2x32xf32>
    %319 = vector.extract_strided_slice %316 {offsets = [0, 64], sizes = [2, 32], strides = [1, 1]} : vector<2x96xf32> to vector<2x32xf32>
    %320 = vector.extract_strided_slice %310 {offsets = [0, 96], sizes = [2, 32], strides = [1, 1]} : vector<2x128xf32> to vector<2x32xf32>
    %321 = math.tanh %320 : vector<2x32xf32>
    %322 = arith.mulf %318, %303 : vector<2x32xf32>
    %323 = arith.mulf %317, %321 : vector<2x32xf32>
    %324 = arith.addf %322, %323 : vector<2x32xf32>
    %325 = math.tanh %324 : vector<2x32xf32>
    %326 = arith.mulf %319, %325 : vector<2x32xf32>
    %327 = vector.extract_strided_slice %22 {offsets = [6, 0, 0], sizes = [1, 2, 128], strides = [1, 1, 1]} : vector<8x2x128xf32> to vector<1x2x128xf32>
    %328 = vector.shape_cast %327 : vector<1x2x128xf32> to vector<2x128xf32>
    %329 = arith.truncf %326 : vector<2x32xf32> to vector<2x32xbf16>
    %cst_46 = arith.constant dense<0.000000e+00> : vector<2x128xf32>
    %330 = tpu.matmul %329, %6, %cst_46 {dimension_numbers = #tpu.dot_dimension_numbers<[1], [0], [0], [1], [0, 0, 1, 1], [], []>} : vector<2x32xbf16>, vector<32x128xbf16>, vector<2x128xf32> -> vector<2x128xf32>
    %331 = arith.addf %328, %330 : vector<2x128xf32>
    %332 = vector.extract_strided_slice %331 {offsets = [0, 0], sizes = [2, 96], strides = [1, 1]} : vector<2x128xf32> to vector<2x96xf32>
    %333 = arith.negf %332 : vector<2x96xf32>
    %334 = math.exp %333 : vector<2x96xf32>
    %cst_47 = arith.constant 1.000000e+00 : f32
    %335 = vector.broadcast %cst_47 : f32 to vector<2x96xf32>
    %336 = arith.addf %335, %334 : vector<2x96xf32>
    %337 = arith.divf %335, %336 : vector<2x96xf32>
    %338 = vector.extract_strided_slice %337 {offsets = [0, 0], sizes = [2, 32], strides = [1, 1]} : vector<2x96xf32> to vector<2x32xf32>
    %339 = vector.extract_strided_slice %337 {offsets = [0, 32], sizes = [2, 32], strides = [1, 1]} : vector<2x96xf32> to vector<2x32xf32>
    %340 = vector.extract_strided_slice %337 {offsets = [0, 64], sizes = [2, 32], strides = [1, 1]} : vector<2x96xf32> to vector<2x32xf32>
    %341 = vector.extract_strided_slice %331 {offsets = [0, 96], sizes = [2, 32], strides = [1, 1]} : vector<2x128xf32> to vector<2x32xf32>
    %342 = math.tanh %341 : vector<2x32xf32>
    %343 = arith.mulf %339, %324 : vector<2x32xf32>
    %344 = arith.mulf %338, %342 : vector<2x32xf32>
    %345 = arith.addf %343, %344 : vector<2x32xf32>
    %346 = math.tanh %345 : vector<2x32xf32>
    %347 = arith.mulf %340, %346 : vector<2x32xf32>
    %348 = vector.extract_strided_slice %22 {offsets = [7, 0, 0], sizes = [1, 2, 128], strides = [1, 1, 1]} : vector<8x2x128xf32> to vector<1x2x128xf32>
    %349 = vector.shape_cast %348 : vector<1x2x128xf32> to vector<2x128xf32>
    %350 = arith.truncf %347 : vector<2x32xf32> to vector<2x32xbf16>
    %cst_48 = arith.constant dense<0.000000e+00> : vector<2x128xf32>
    %351 = tpu.matmul %350, %6, %cst_48 {dimension_numbers = #tpu.dot_dimension_numbers<[1], [0], [0], [1], [0, 0, 1, 1], [], []>} : vector<2x32xbf16>, vector<32x128xbf16>, vector<2x128xf32> -> vector<2x128xf32>
    %352 = arith.addf %349, %351 : vector<2x128xf32>
    %353 = vector.extract_strided_slice %352 {offsets = [0, 0], sizes = [2, 96], strides = [1, 1]} : vector<2x128xf32> to vector<2x96xf32>
    %354 = arith.negf %353 : vector<2x96xf32>
    %355 = math.exp %354 : vector<2x96xf32>
    %cst_49 = arith.constant 1.000000e+00 : f32
    %356 = vector.broadcast %cst_49 : f32 to vector<2x96xf32>
    %357 = arith.addf %356, %355 : vector<2x96xf32>
    %358 = arith.divf %356, %357 : vector<2x96xf32>
    %359 = vector.extract_strided_slice %358 {offsets = [0, 0], sizes = [2, 32], strides = [1, 1]} : vector<2x96xf32> to vector<2x32xf32>
    %360 = vector.extract_strided_slice %358 {offsets = [0, 32], sizes = [2, 32], strides = [1, 1]} : vector<2x96xf32> to vector<2x32xf32>
    %361 = vector.extract_strided_slice %358 {offsets = [0, 64], sizes = [2, 32], strides = [1, 1]} : vector<2x96xf32> to vector<2x32xf32>
    %362 = vector.extract_strided_slice %352 {offsets = [0, 96], sizes = [2, 32], strides = [1, 1]} : vector<2x128xf32> to vector<2x32xf32>
    %363 = math.tanh %362 : vector<2x32xf32>
    %364 = arith.mulf %360, %345 : vector<2x32xf32>
    %365 = arith.mulf %359, %363 : vector<2x32xf32>
    %366 = arith.addf %364, %365 : vector<2x32xf32>
    %367 = math.tanh %366 : vector<2x32xf32>
    %368 = arith.mulf %361, %367 : vector<2x32xf32>
    %369 = vector.shape_cast %221 : vector<2x32xf32> to vector<2x1x32xf32>
    %370 = vector.shape_cast %242 : vector<2x32xf32> to vector<2x1x32xf32>
    %371 = vector.shape_cast %263 : vector<2x32xf32> to vector<2x1x32xf32>
    %372 = vector.shape_cast %284 : vector<2x32xf32> to vector<2x1x32xf32>
    %373 = vector.shape_cast %305 : vector<2x32xf32> to vector<2x1x32xf32>
    %374 = vector.shape_cast %326 : vector<2x32xf32> to vector<2x1x32xf32>
    %375 = vector.shape_cast %347 : vector<2x32xf32> to vector<2x1x32xf32>
    %376 = vector.shape_cast %368 : vector<2x32xf32> to vector<2x1x32xf32>
    %377 = tpu.concatenate %369, %370, %371, %372, %373, %374, %375, %376 in 1 : vector<2x1x32xf32>, vector<2x1x32xf32>, vector<2x1x32xf32>, vector<2x1x32xf32>, vector<2x1x32xf32>, vector<2x1x32xf32>, vector<2x1x32xf32>, vector<2x1x32xf32> -> vector<2x8x32xf32>
    "tpu.trace_start"() <{level = 10 : i32, message = "bth,bsh->bts"}> : () -> ()
    %cst_50 = arith.constant dense<0.000000e+00> : vector<2x8x8xf32>
    %378 = tpu.matmul %377, %200, %cst_50 {dimension_numbers = #tpu.dot_dimension_numbers<[2], [2], [1], [1], [0, 0, 0, 1, 1, 1], [0], [0]>} : vector<2x8x32xf32>, vector<2x8x32xf32>, vector<2x8x8xf32> -> vector<2x8x8xf32>
    "tpu.trace_stop"() : () -> ()
    %cst_51 = arith.constant dense<0xFF800000> : vector<2x8xf32>
    %379 = vector.multi_reduction <maximumf>, %378, %cst_51 [2] : vector<2x8x8xf32> to vector<2x8xf32>
    %380 = vector.shape_cast %379 : vector<2x8xf32> to vector<2x8x1xf32>
    %381 = vector.broadcast %380 : vector<2x8x1xf32> to vector<2x8x8xf32>
    %382 = arith.subf %378, %381 : vector<2x8x8xf32>
    %383 = math.exp %382 : vector<2x8x8xf32>
    %cst_52 = arith.constant dense<0.000000e+00> : vector<2x8xf32>
    %384 = vector.multi_reduction <add>, %383, %cst_52 [2] : vector<2x8x8xf32> to vector<2x8xf32>
    %385 = vector.shape_cast %384 : vector<2x8xf32> to vector<2x8x1xf32>
    %386 = vector.broadcast %385 : vector<2x8x1xf32> to vector<2x8x8xf32>
    %387 = arith.divf %383, %386 : vector<2x8x8xf32>
    %388 = vector.shape_cast %7 : vector<1x32xf32> to vector<1x1x32xf32>
    %389 = vector.broadcast %388 : vector<1x1x32xf32> to vector<2x8x32xf32>
    %390 = arith.mulf %200, %389 : vector<2x8x32xf32>
    %cst_53 = arith.constant dense<0.000000e+00> : vector<2x8xf32>
    %391 = vector.multi_reduction <add>, %390, %cst_53 [2] : vector<2x8x32xf32> to vector<2x8xf32>
    %392 = vector.shape_cast %391 : vector<2x8xf32> to vector<2x1x8xf32>
    %393 = vector.broadcast %392 : vector<2x1x8xf32> to vector<2x8x8xf32>
    %394 = arith.mulf %387, %393 : vector<2x8x8xf32>
    %cst_54 = arith.constant dense<0.000000e+00> : vector<2x8xf32>
    %395 = vector.multi_reduction <add>, %394, %cst_54 [2] : vector<2x8x8xf32> to vector<2x8xf32>
    %396 = vector.shape_cast %8 : vector<1x32xf32> to vector<1x1x32xf32>
    %397 = vector.broadcast %396 : vector<1x1x32xf32> to vector<2x8x32xf32>
    %398 = arith.mulf %377, %397 : vector<2x8x32xf32>
    %cst_55 = arith.constant dense<0.000000e+00> : vector<2x8xf32>
    %399 = vector.multi_reduction <add>, %398, %cst_55 [2] : vector<2x8x32xf32> to vector<2x8xf32>
    %400 = arith.addf %395, %399 : vector<2x8xf32>
    %c0_56 = arith.constant 0 : index
    %c0_57 = arith.constant 0 : index
    %401 = vector.load %arg9[%c0_56, %c0_57] : memref<1x1xf32, #tpu.memory_space<vmem>>, vector<1x1xf32>
    %402 = vector.broadcast %401 : vector<1x1xf32> to vector<2x8xf32>
    %403 = arith.addf %400, %402 : vector<2x8xf32>
    %c0_58 = arith.constant 0 : index
    %c0_59 = arith.constant 0 : index
    %404 = vector.load %arg10[%c0_58, %c0_59] : memref<2x8xf32, #tpu.memory_space<vmem>>, vector<2x8xf32>
    tpu.vector_store %arg10[%c0_58, %c0_59], %403 {strides = array<i32>} : memref<2x8xf32, #tpu.memory_space<vmem>>, vector<2x8xf32>,
    return
  }
}

</mosaic_0001>

<llo_original>
// kernel: tpu_custom_call.1
$region0: #{tpu_custom_call.1}
  #allocation0 [shape = 'u32[]', space=smem, size = 0x4, offset = 0x4, fixed_abs, tag = 'smem constant byte address 0x4 - core index']
  #allocation1 [shape = 'u32[144,128]{1,0:T(1,128)}', space=vmem, size = 0x12000, scoped, tag = 'internal scratch']
  #allocation2 [shape = 'f32[1,1]{1,0:T(1,128)S(1)}', space=vmem, size = 0x200, scoped, tag = 'scoped memory for tpu_custom_call.1']
  %s0 = inlined_call_operand.vmem [shape: f32[8,2,1], index: 0, kind: input, shape index: {}]
  %s1 = inlined_call_operand.vmem [shape: f32[1,128], index: 1, kind: input, shape index: {}]
  %s2 = inlined_call_operand.hbm [shape: f32[1,128], index: 2, kind: input, shape index: {}]
  %s3 = inlined_call_operand.hbm [shape: f32[1,128], index: 3, kind: input, shape index: {}]
  %s4 = inlined_call_operand.vmem [shape: f32[1,128], index: 4, kind: input, shape index: {}]
  %s5 = inlined_call_operand.vmem [shape: bf16[32,128], index: 5, kind: input, shape index: {}]
  %s6 = inlined_call_operand.vmem [shape: bf16[32,128], index: 6, kind: input, shape index: {}]
  %s7 = inlined_call_operand.vmem [shape: f32[1,32], index: 7, kind: input, shape index: {}]
  %s8 = inlined_call_operand.vmem [shape: f32[1,32], index: 8, kind: input, shape index: {}]
  %s9 = inlined_call_operand.<no memory space> [shape: f32[1,1], index: 9, kind: input, shape index: {}]
  %s10 = inlined_call_operand.hbm [shape: f32[2,8], index: 10, kind: output, shape index: {}]
  %s11 = sld [smem:[#allocation0]]
  $region58: #{tpu_custom_call.1} parent=0
    _
  %s13 = ssub.s32 1, %s11
  %s14 = scalar_select 0, %s13, %s11
  %v15 = vstv %s9
  %16 = vst [vmem:[#allocation2] sm:$0x1] %v15
  $region1: #{tpu_custom_call.1} parent=0
    #allocation3 [shape = 'u8[512]{0}', space=vmem, size = 0x400, scoped, tag = 'input window, operand 2, single buffered']
    #allocation4 [shape = 's32[1]{0}', space=sflag, size = 0x4, scoped, tag = 'scoped memory for tpu_custom_call.1']
    #allocation5 [shape = 's32[1]{0}', space=sflag, size = 0x4, scoped, tag = 'scoped memory for tpu_custom_call.1']
    #allocation6 [shape = 'u8[512]{0}', space=vmem, size = 0x400, scoped, tag = 'input window, operand 3, single buffered']
    #allocation7 [shape = 's32[1]{0}', space=sflag, size = 0x4, scoped, tag = 'scoped memory for tpu_custom_call.1']
    #allocation8 [shape = 'u8[1024]{0}', space=vmem, size = 0x400, scoped, tag = 'output window, operand 0, single buffered']
    %17 = vsyncpa [#allocation4], 0
    %18 = vsyncpa [#allocation7], 0
    %19 = vsyncpa [#allocation5], 0
    // Predicated region
    $region2: #{tpu_custom_call.1} parent=1 // pred_check
      _
    $region3: #{tpu_custom_call.1} parent=1 // pred_check_branch
      %21 = sbr.rel (0) target = $region5
    $region4: #{tpu_custom_call.1} parent=1 // pred_region
      _
    $region5: #{tpu_custom_call.1} parent=1 // pred_fallthru
      _
    // Predicated region
    $region6: #{tpu_custom_call.1} parent=1 // pred_check
      _
    $region7: #{tpu_custom_call.1} parent=1 // pred_check_branch
      %23 = sbr.rel (0) target = $region9
    $region8: #{tpu_custom_call.1} parent=1 // pred_region
      _
    $region9: #{tpu_custom_call.1} parent=1 // pred_fallthru
      _
    // Predicated region
    $region10: #{tpu_custom_call.1} parent=1 // pred_check
      _
    $region11: #{tpu_custom_call.1} parent=1 // pred_check_branch
      %25 = sbr.rel (0) target = $region13
    $region12: #{tpu_custom_call.1} parent=1 // pred_region
      %s27 = ssub.s32 16, 16
      %28 = vsyncadd [#allocation4], %s27
      %s30 = sshll.u32 [#allocation3], 4
      %s31 = int_to_ptr.vmem [resolvable:$true] %s30
      %33 = dma.hbm_to_vmem [thread:$0]  %s2, 16, %s31, [#allocation4]
    $region13: #{tpu_custom_call.1} parent=1 // pred_fallthru
      _
    // Predicated region
    $region14: #{tpu_custom_call.1} parent=1 // pred_check
      _
    $region15: #{tpu_custom_call.1} parent=1 // pred_check_branch
      %35 = sbr.rel (0) target = $region17
    $region16: #{tpu_custom_call.1} parent=1 // pred_region
      %s37 = ssub.s32 16, 16
      %38 = vsyncadd [#allocation7], %s37
      %s40 = sshll.u32 [#allocation6], 4
      %s41 = int_to_ptr.vmem [resolvable:$true] %s40
      %43 = dma.hbm_to_vmem [thread:$0]  %s3, 16, %s41, [#allocation7]
    $region17: #{tpu_custom_call.1} parent=1 // pred_fallthru
      _
    // Predicated region
    $region18: #{tpu_custom_call.1} parent=1 // pred_check
      _
    $region19: #{tpu_custom_call.1} parent=1 // pred_check_branch
      %45 = sbr.rel (0) target = $region21
    $region20: #{tpu_custom_call.1} parent=1 // pred_region
      _
    $region21: #{tpu_custom_call.1} parent=1 // pred_fallthru
      _
    // Predicated region
    $region22: #{tpu_custom_call.1} parent=1 // pred_check
      _
    $region23: #{tpu_custom_call.1} parent=1 // pred_check_branch
      %47 = sbr.rel (0) target = $region25
    $region24: #{tpu_custom_call.1} parent=1 // pred_region
      _
    $region25: #{tpu_custom_call.1} parent=1 // pred_fallthru
      _
    // Predicated region
    $region26: #{tpu_custom_call.1} parent=1 // pred_check
      _
    $region27: #{tpu_custom_call.1} parent=1 // pred_check_branch
      %49 = sbr.rel (0) target = $region29
    $region28: #{tpu_custom_call.1} parent=1 // pred_region
      _
    $region29: #{tpu_custom_call.1} parent=1 // pred_fallthru
      _
    // Predicated region
    $region30: #{tpu_custom_call.1} parent=1 // pred_check
      _
    $region31: #{tpu_custom_call.1} parent=1 // pred_check_branch
      %51 = sbr.rel (0) target = $region33
    $region32: #{tpu_custom_call.1} parent=1 // pred_region
      _
    $region33: #{tpu_custom_call.1} parent=1 // pred_fallthru
      _
    // Predicated region
    $region34: #{tpu_custom_call.1} parent=1 // pred_check
      _
    $region35: #{tpu_custom_call.1} parent=1 // pred_check_branch
      %53 = sbr.rel (0) target = $region37
    $region36: #{tpu_custom_call.1} parent=1 // pred_region
      _
    $region37: #{tpu_custom_call.1} parent=1 // pred_fallthru
      _
    // Predicated region
    $region38: #{tpu_custom_call.1} parent=1 // pred_check
      _
    $region39: #{tpu_custom_call.1} parent=1 // pred_check_branch
      %55 = sbr.rel (0) target = $region41
    $region40: #{tpu_custom_call.1} parent=1 // pred_region
      _
    $region41: #{tpu_custom_call.1} parent=1 // pred_fallthru
      _
    // Predicated region
    $region42: #{tpu_custom_call.1} parent=1 // pred_check
      _
    $region43: #{tpu_custom_call.1} parent=1 // pred_check_branch
      %57 = sbr.rel (0) target = $region45
    $region44: #{tpu_custom_call.1} parent=1 // pred_region
      %58 = dma.done [#allocation4], 16
    $region45: #{tpu_custom_call.1} parent=1 // pred_fallthru
      _
    // Predicated region
    $region46: #{tpu_custom_call.1} parent=1 // pred_check
      _
    $region47: #{tpu_custom_call.1} parent=1 // pred_check_branch
      %60 = sbr.rel (0) target = $region49
    $region48: #{tpu_custom_call.1} parent=1 // pred_region
      %61 = dma.done [#allocation7], 16
    $region49: #{tpu_custom_call.1} parent=1 // pred_fallthru
      _
    %v63 = vld [vmem:[%s0] sm:$0x3]
    %v64 = vld [vmem:[%s0 + $0x2] sm:$0x3]
    %v65 = vld [vmem:[%s0 + $0x4] sm:$0x3]
    %v66 = vld [vmem:[%s0 + $0x6] sm:$0x3]
    %v67 = vld [vmem:[%s0 + $0x8] sm:$0x3]
    %v68 = vld [vmem:[%s0 + $0xa] sm:$0x3]
    %v69 = vld [vmem:[%s0 + $0xc] sm:$0x3]
    %v70 = vld [vmem:[%s0 + $0xe] sm:$0x3]
    %v71 = vld [vmem:[%s1] sm:$0x1]
    %v72 = vld [vmem:[#allocation3] sm:$0x1]
    %v73 = vld [vmem:[#allocation6] sm:$0x1]
    %v74 = vld [vmem:[%s4] sm:$0x1]
    %v75 = vld [vmem:[%s5] sm:$0xf]
    %v76 = vld [vmem:[%s5 + $0x4] sm:$0xf]
    %v77 = vld [vmem:[%s5 + $0x8] sm:$0xf]
    %v78 = vld [vmem:[%s5 + $0xc] sm:$0xf]
    %v79 = vld [vmem:[%s6] sm:$0xf]
    %v80 = vld [vmem:[%s6 + $0x4] sm:$0xf]
    %v81 = vld [vmem:[%s6 + $0x8] sm:$0xf]
    %v82 = vld [vmem:[%s6 + $0xc] sm:$0xf]
    %v83 = vld [vmem:[%s7] sm:$0x1]
    %v84 = vld [vmem:[%s8] sm:$0x1]
    %86 = vset.pattern.permute.xlu0 0
    %87 = vperm.xlu0 %86, %v63
    %v88 = vpop.permute.xlu0 %87
    %91 = vset.pattern.permute.xlu0 0
    %92 = vperm.xlu0 %91, %v64
    %v93 = vpop.permute.xlu0 %92
    %96 = vset.pattern.permute.xlu0 0
    %97 = vperm.xlu0 %96, %v65
    %v98 = vpop.permute.xlu0 %97
    %101 = vset.pattern.permute.xlu0 0
    %102 = vperm.xlu0 %101, %v66
    %v103 = vpop.permute.xlu0 %102
    %106 = vset.pattern.permute.xlu0 0
    %107 = vperm.xlu0 %106, %v67
    %v108 = vpop.permute.xlu0 %107
    %111 = vset.pattern.permute.xlu0 0
    %112 = vperm.xlu0 %111, %v68
    %v113 = vpop.permute.xlu0 %112
    %116 = vset.pattern.permute.xlu0 0
    %117 = vperm.xlu0 %116, %v69
    %v118 = vpop.permute.xlu0 %117
    %121 = vset.pattern.permute.xlu0 0
    %122 = vperm.xlu0 %121, %v70
    %v123 = vpop.permute.xlu0 %122
    %v126 = vlaneseq
    %v127 = vshrl.u32 %v126, 7
    %v128 = vsub.s32 0, %v127
    %v129 = vrot.slane %v71, %v128
    %v131 = vmul.f32 %v88, %v129
    %v132 = vmul.f32 %v93, %v129
    %v133 = vmul.f32 %v98, %v129
    %v134 = vmul.f32 %v103, %v129
    %v135 = vmul.f32 %v108, %v129
    %v136 = vmul.f32 %v113, %v129
    %v137 = vmul.f32 %v118, %v129
    %v138 = vmul.f32 %v123, %v129
    %v140 = vlaneseq
    %v141 = vshrl.u32 %v140, 7
    %v142 = vsub.s32 0, %v141
    %v143 = vrot.slane %v72, %v142
    %v145 = vadd.f32 %v131, %v143
    %v146 = vadd.f32 %v132, %v143
    %v147 = vadd.f32 %v133, %v143
    %v148 = vadd.f32 %v134, %v143
    %v149 = vadd.f32 %v135, %v143
    %v150 = vadd.f32 %v136, %v143
    %v151 = vadd.f32 %v137, %v143
    %v152 = vadd.f32 %v138, %v143
    %v154 = vlaneseq
    %v155 = vshrl.u32 %v154, 7
    %v156 = vsub.s32 0, %v155
    %v157 = vrot.slane %v73, %v156
    %v159 = vmul.f32 %v88, %v157
    %v160 = vmul.f32 %v93, %v157
    %v161 = vmul.f32 %v98, %v157
    %v162 = vmul.f32 %v103, %v157
    %v163 = vmul.f32 %v108, %v157
    %v164 = vmul.f32 %v113, %v157
    %v165 = vmul.f32 %v118, %v157
    %v166 = vmul.f32 %v123, %v157
    %v168 = vlaneseq
    %v169 = vshrl.u32 %v168, 7
    %v170 = vsub.s32 0, %v169
    %v171 = vrot.slane %v74, %v170
    %v173 = vadd.f32 %v159, %v171
    %v174 = vadd.f32 %v160, %v171
    %v175 = vadd.f32 %v161, %v171
    %v176 = vadd.f32 %v162, %v171
    %v177 = vadd.f32 %v163, %v171
    %v178 = vadd.f32 %v164, %v171
    %v179 = vadd.f32 %v165, %v171
    %v180 = vadd.f32 %v166, %v171
    %v185 = vunpack.c.l.b16 %v75
    %v186 = vunpack.c.l.b16 %v76
    %v187 = vunpack.c.l.b16 %v77
    %v188 = vunpack.c.l.b16 %v78
    %v189 = vpack.c.b16 %v186, %v185
    %v190 = vpack.c.b16 %v188, %v187
    %vm193 = vcmask 261120
    %v195 = vsel %vm193, 0, 0
    %197 = vmatprep.subr.bf16.mxu0 0
    %198 = vmatpush1.bf16.msra.mxu0 %v189
    %199 = vmatprep.subr.bf16.mxu0 0
    %200 = vmatpush1.bf16.msra.mxu0 %v190
    %201 = vmatprep.subr.bf16.mxu0 0
    %202 = vmatpush1.bf16.msra.mxu0 0
    %203 = vmatprep.subr.bf16.mxu0 0
    %204 = vmatpush1.bf16.msra.mxu0 0
    %205 = vmatprep.subr.bf16.mxu0 0
    %206 = vmatpush1.bf16.msra.mxu0 0
    %207 = vmatprep.subr.bf16.mxu0 0
    %208 = vmatpush1.bf16.msra.mxu0 0
    %209 = vmatprep.subr.bf16.mxu0 0
    %210 = vmatpush1.bf16.msra.mxu0 0
    %211 = vmatprep.subr.bf16.mxu0 0
    %212 = vmatpush1.bf16.msra.mxu0 0
    %213 = vmatprep.subr.bf16.mxu0 0
    %214 = vmatpush1.bf16.msra.mxu0 0
    %215 = vmatprep.subr.bf16.mxu0 0
    %216 = vmatpush1.bf16.msra.mxu0 0
    %217 = vmatprep.subr.bf16.mxu0 0
    %218 = vmatpush1.bf16.msra.mxu0 0
    %219 = vmatprep.subr.bf16.mxu0 0
    %220 = vmatpush1.bf16.msra.mxu0 0
    %221 = vmatprep.subr.bf16.mxu0 0
    %222 = vmatpush1.bf16.msra.mxu0 0
    %223 = vmatprep.subr.bf16.mxu0 0
    %224 = vmatpush1.bf16.msra.mxu0 0
    %225 = vmatprep.subr.bf16.mxu0 0
    %226 = vmatpush1.bf16.msra.mxu0 0
    %227 = vmatprep.subr.bf16.mxu0 0
    %228 = vmatpush1.bf16.msra.mxu0 0
    %229 = vmatprep.mubr.bf16.mxu0 0
    %230 = vmatmul.mubr.bf16.gmra.mrb[0].mxu0 %v195
    %v231 = vpop.f32.mrb[0].mxu0
    %v232 = vadd.f32 0.0, %v231
    %v233 = vpop.f32.mrb[0].mxu0
    %v234 = vpop.f32.mrb[0].mxu0
    %v235 = vpop.f32.mrb[0].mxu0
    %236 = vdwg.mxu0
    %v237 = vadd.f32 %v145, %v232
    %v238 = vxor.u32 %v237, 2147483648
    %v239 = vmul.f32 %v238, 1.442695
    %v240 = vpow.pop %v239
    %v241 = vadd.f32 %v240, 1.0
    %v242 = vrcp.pop %v241
    %v243 = vmul.f32 1.0, %v242
    %v244 = vtanh.pop %v237
    %v245 = vmul.f32 %v243, 0.0
    %247 = vrot.lane.b32.xlu0 %v244, 32
    %v248 = vpop.permute.xlu0 %247
    %v250 = vmul.f32 %v243, %v248
    %252 = vrot.lane.b32.xlu0 %v250, 32
    %v253 = vpop.permute.xlu0 %252
    %v255 = vadd.f32 %v245, %v253
    %v256 = vtanh.pop %v255
    %258 = vrot.lane.b32.xlu0 %v256, 32
    %v259 = vpop.permute.xlu0 %258
    %v261 = vmul.f32 %v243, %v259
    %v262 = vpack.c.bf16 %v261, %v261
    %264 = vrot.lane.b32.xlu0 %v262, 64
    %v265 = vpop.permute.xlu0 %264
    %v267 = vsel %vm193, %v265, 0
    %269 = vmatprep.subr.bf16.mxu0 0
    %270 = vmatpush1.bf16.msra.mxu0 %v189
    %271 = vmatprep.subr.bf16.mxu0 0
    %272 = vmatpush1.bf16.msra.mxu0 %v190
    %273 = vmatprep.subr.bf16.mxu0 0
    %274 = vmatpush1.bf16.msra.mxu0 0
    %275 = vmatprep.subr.bf16.mxu0 0
    %276 = vmatpush1.bf16.msra.mxu0 0
    %277 = vmatprep.subr.bf16.mxu0 0
    %278 = vmatpush1.bf16.msra.mxu0 0
    %279 = vmatprep.subr.bf16.mxu0 0
    %280 = vmatpush1.bf16.msra.mxu0 0
    %281 = vmatprep.subr.bf16.mxu0 0
    %282 = vmatpush1.bf16.msra.mxu0 0
    %283 = vmatprep.subr.bf16.mxu0 0
    %284 = vmatpush1.bf16.msra.mxu0 0
    %285 = vmatprep.subr.bf16.mxu0 0
    %286 = vmatpush1.bf16.msra.mxu0 0
    %287 = vmatprep.subr.bf16.mxu0 0
    %288 = vmatpush1.bf16.msra.mxu0 0
    %289 = vmatprep.subr.bf16.mxu0 0
    %290 = vmatpush1.bf16.msra.mxu0 0
    %291 = vmatprep.subr.bf16.mxu0 0
    %292 = vmatpush1.bf16.msra.mxu0 0
    %293 = vmatprep.subr.bf16.mxu0 0
    %294 = vmatpush1.bf16.msra.mxu0 0
    %295 = vmatprep.subr.bf16.mxu0 0
    %296 = vmatpush1.bf16.msra.mxu0 0
    %297 = vmatprep.subr.bf16.mxu0 0
    %298 = vmatpush1.bf16.msra.mxu0 0
    %299 = vmatprep.subr.bf16.mxu0 0
    %300 = vmatpush1.bf16.msra.mxu0 0
    %301 = vmatprep.mubr.bf16.mxu0 0
    %302 = vmatmul.mubr.bf16.gmra.mrb[0].mxu0 %v267
    %v303 = vpop.f32.mrb[0].mxu0
    %v304 = vadd.f32 0.0, %v303
    %v305 = vpop.f32.mrb[0].mxu0
    %v306 = vpop.f32.mrb[0].mxu0
    %v307 = vpop.f32.mrb[0].mxu0
    %308 = vdwg.mxu0
    %v309 = vadd.f32 %v146, %v304
    %v310 = vxor.u32 %v309, 2147483648
    %v311 = vmul.f32 %v310, 1.442695
    %v312 = vpow.pop %v311
    %v313 = vadd.f32 %v312, 1.0
    %v314 = vrcp.pop %v313
    %v315 = vmul.f32 1.0, %v314
    %v316 = vtanh.pop %v309
    %v317 = vmul.f32 %v315, %v255
    %319 = vrot.lane.b32.xlu0 %v316, 32
    %v320 = vpop.permute.xlu0 %319
    %v322 = vmul.f32 %v315, %v320
    %324 = vrot.lane.b32.xlu0 %v322, 32
    %v325 = vpop.permute.xlu0 %324
    %v327 = vadd.f32 %v317, %v325
    %v328 = vtanh.pop %v327
    %330 = vrot.lane.b32.xlu0 %v328, 32
    %v331 = vpop.permute.xlu0 %330
    %v333 = vmul.f32 %v315, %v331
    %v334 = vpack.c.bf16 %v333, %v333
    %336 = vrot.lane.b32.xlu0 %v334, 64
    %v337 = vpop.permute.xlu0 %336
    %v339 = vsel %vm193, %v337, 0
    %341 = vmatprep.subr.bf16.mxu0 0
    %342 = vmatpush1.bf16.msra.mxu0 %v189
    %343 = vmatprep.subr.bf16.mxu0 0
    %344 = vmatpush1.bf16.msra.mxu0 %v190
    %345 = vmatprep.subr.bf16.mxu0 0
    %346 = vmatpush1.bf16.msra.mxu0 0
    %347 = vmatprep.subr.bf16.mxu0 0
    %348 = vmatpush1.bf16.msra.mxu0 0
    %349 = vmatprep.subr.bf16.mxu0 0
    %350 = vmatpush1.bf16.msra.mxu0 0
    %351 = vmatprep.subr.bf16.mxu0 0
    %352 = vmatpush1.bf16.msra.mxu0 0
    %353 = vmatprep.subr.bf16.mxu0 0
    %354 = vmatpush1.bf16.msra.mxu0 0
    %355 = vmatprep.subr.bf16.mxu0 0
    %356 = vmatpush1.bf16.msra.mxu0 0
    %357 = vmatprep.subr.bf16.mxu0 0
    %358 = vmatpush1.bf16.msra.mxu0 0
    %359 = vmatprep.subr.bf16.mxu0 0
    %360 = vmatpush1.bf16.msra.mxu0 0
    %361 = vmatprep.subr.bf16.mxu0 0
    %362 = vmatpush1.bf16.msra.mxu0 0
    %363 = vmatprep.subr.bf16.mxu0 0
    %364 = vmatpush1.bf16.msra.mxu0 0
    %365 = vmatprep.subr.bf16.mxu0 0
    %366 = vmatpush1.bf16.msra.mxu0 0
    %367 = vmatprep.subr.bf16.mxu0 0
    %368 = vmatpush1.bf16.msra.mxu0 0
    %369 = vmatprep.subr.bf16.mxu0 0
    %370 = vmatpush1.bf16.msra.mxu0 0
    %371 = vmatprep.subr.bf16.mxu0 0
    %372 = vmatpush1.bf16.msra.mxu0 0
    %373 = vmatprep.mubr.bf16.mxu0 0
    %374 = vmatmul.mubr.bf16.gmra.mrb[0].mxu0 %v339
    %v375 = vpop.f32.mrb[0].mxu0
    %v376 = vadd.f32 0.0, %v375
    %v377 = vpop.f32.mrb[0].mxu0
    %v378 = vpop.f32.mrb[0].mxu0
    %v379 = vpop.f32.mrb[0].mxu0
    %380 = vdwg.mxu0
    %v381 = vadd.f32 %v147, %v376
    %v382 = vxor.u32 %v381, 2147483648
    %v383 = vmul.f32 %v382, 1.442695
    %v384 = vpow.pop %v383
    %v385 = vadd.f32 %v384, 1.0
    %v386 = vrcp.pop %v385
    %v387 = vmul.f32 1.0, %v386
    %v388 = vtanh.pop %v381
    %v389 = vmul.f32 %v387, %v327
    %391 = vrot.lane.b32.xlu0 %v388, 32
    %v392 = vpop.permute.xlu0 %391
    %v394 = vmul.f32 %v387, %v392
    %396 = vrot.lane.b32.xlu0 %v394, 32
    %v397 = vpop.permute.xlu0 %396
    %v399 = vadd.f32 %v389, %v397
    %v400 = vtanh.pop %v399
    %402 = vrot.lane.b32.xlu0 %v400, 32
    %v403 = vpop.permute.xlu0 %402
    %v405 = vmul.f32 %v387, %v403
    %v406 = vpack.c.bf16 %v405, %v405
    %408 = vrot.lane.b32.xlu0 %v406, 64
    %v409 = vpop.permute.xlu0 %408
    %v411 = vsel %vm193, %v409, 0
    %413 = vmatprep.subr.bf16.mxu0 0
    %414 = vmatpush1.bf16.msra.mxu0 %v189
    %415 = vmatprep.subr.bf16.mxu0 0
    %416 = vmatpush1.bf16.msra.mxu0 %v190
    %417 = vmatprep.subr.bf16.mxu0 0
    %418 = vmatpush1.bf16.msra.mxu0 0
    %419 = vmatprep.subr.bf16.mxu0 0
    %420 = vmatpush1.bf16.msra.mxu0 0
    %421 = vmatprep.subr.bf16.mxu0 0
    %422 = vmatpush1.bf16.msra.mxu0 0
    %423 = vmatprep.subr.bf16.mxu0 0
    %424 = vmatpush1.bf16.msra.mxu0 0
    %425 = vmatprep.subr.bf16.mxu0 0
    %426 = vmatpush1.bf16.msra.mxu0 0
    %427 = vmatprep.subr.bf16.mxu0 0
    %428 = vmatpush1.bf16.msra.mxu0 0
    %429 = vmatprep.subr.bf16.mxu0 0
    %430 = vmatpush1.bf16.msra.mxu0 0
    %431 = vmatprep.subr.bf16.mxu0 0
    %432 = vmatpush1.bf16.msra.mxu0 0
    %433 = vmatprep.subr.bf16.mxu0 0
    %434 = vmatpush1.bf16.msra.mxu0 0
    %435 = vmatprep.subr.bf16.mxu0 0
    %436 = vmatpush1.bf16.msra.mxu0 0
    %437 = vmatprep.subr.bf16.mxu0 0
    %438 = vmatpush1.bf16.msra.mxu0 0
    %439 = vmatprep.subr.bf16.mxu0 0
    %440 = vmatpush1.bf16.msra.mxu0 0
    %441 = vmatprep.subr.bf16.mxu0 0
    %442 = vmatpush1.bf16.msra.mxu0 0
    %443 = vmatprep.subr.bf16.mxu0 0
    %444 = vmatpush1.bf16.msra.mxu0 0
    %445 = vmatprep.mubr.bf16.mxu0 0
    %446 = vmatmul.mubr.bf16.gmra.mrb[0].mxu0 %v411
    %v447 = vpop.f32.mrb[0].mxu0
    %v448 = vadd.f32 0.0, %v447
    %v449 = vpop.f32.mrb[0].mxu0
    %v450 = vpop.f32.mrb[0].mxu0
    %v451 = vpop.f32.mrb[0].mxu0
    %452 = vdwg.mxu0
    %v453 = vadd.f32 %v148, %v448
    %v454 = vxor.u32 %v453, 2147483648
    %v455 = vmul.f32 %v454, 1.442695
    %v456 = vpow.pop %v455
    %v457 = vadd.f32 %v456, 1.0
    %v458 = vrcp.pop %v457
    %v459 = vmul.f32 1.0, %v458
    %v460 = vtanh.pop %v453
    %v461 = vmul.f32 %v459, %v399
    %463 = vrot.lane.b32.xlu0 %v460, 32
    %v464 = vpop.permute.xlu0 %463
    %v466 = vmul.f32 %v459, %v464
    %468 = vrot.lane.b32.xlu0 %v466, 32
    %v469 = vpop.permute.xlu0 %468
    %v471 = vadd.f32 %v461, %v469
    %v472 = vtanh.pop %v471
    %474 = vrot.lane.b32.xlu0 %v472, 32
    %v475 = vpop.permute.xlu0 %474
    %v477 = vmul.f32 %v459, %v475
    %v478 = vpack.c.bf16 %v477, %v477
    %480 = vrot.lane.b32.xlu0 %v478, 64
    %v481 = vpop.permute.xlu0 %480
    %v483 = vsel %vm193, %v481, 0
    %485 = vmatprep.subr.bf16.mxu0 0
    %486 = vmatpush1.bf16.msra.mxu0 %v189
    %487 = vmatprep.subr.bf16.mxu0 0
    %488 = vmatpush1.bf16.msra.mxu0 %v190
    %489 = vmatprep.subr.bf16.mxu0 0
    %490 = vmatpush1.bf16.msra.mxu0 0
    %491 = vmatprep.subr.bf16.mxu0 0
    %492 = vmatpush1.bf16.msra.mxu0 0
    %493 = vmatprep.subr.bf16.mxu0 0
    %494 = vmatpush1.bf16.msra.mxu0 0
    %495 = vmatprep.subr.bf16.mxu0 0
    %496 = vmatpush1.bf16.msra.mxu0 0
    %497 = vmatprep.subr.bf16.mxu0 0
    %498 = vmatpush1.bf16.msra.mxu0 0
    %499 = vmatprep.subr.bf16.mxu0 0
    %500 = vmatpush1.bf16.msra.mxu0 0
    %501 = vmatprep.subr.bf16.mxu0 0
    %502 = vmatpush1.bf16.msra.mxu0 0
    %503 = vmatprep.subr.bf16.mxu0 0
    %504 = vmatpush1.bf16.msra.mxu0 0
    %505 = vmatprep.subr.bf16.mxu0 0
    %506 = vmatpush1.bf16.msra.mxu0 0
    %507 = vmatprep.subr.bf16.mxu0 0
    %508 = vmatpush1.bf16.msra.mxu0 0
    %509 = vmatprep.subr.bf16.mxu0 0
    %510 = vmatpush1.bf16.msra.mxu0 0
    %511 = vmatprep.subr.bf16.mxu0 0
    %512 = vmatpush1.bf16.msra.mxu0 0
    %513 = vmatprep.subr.bf16.mxu0 0
    %514 = vmatpush1.bf16.msra.mxu0 0
    %515 = vmatprep.subr.bf16.mxu0 0
    %516 = vmatpush1.bf16.msra.mxu0 0
    %517 = vmatprep.mubr.bf16.mxu0 0
    %518 = vmatmul.mubr.bf16.gmra.mrb[0].mxu0 %v483
    %v519 = vpop.f32.mrb[0].mxu0
    %v520 = vadd.f32 0.0, %v519
    %v521 = vpop.f32.mrb[0].mxu0
    %v522 = vpop.f32.mrb[0].mxu0
    %v523 = vpop.f32.mrb[0].mxu0
    %524 = vdwg.mxu0
    %v525 = vadd.f32 %v149, %v520
    %v526 = vxor.u32 %v525, 2147483648
    %v527 = vmul.f32 %v526, 1.442695
    %v528 = vpow.pop %v527
    %v529 = vadd.f32 %v528, 1.0
    %v530 = vrcp.pop %v529
    %v531 = vmul.f32 1.0, %v530
    %v532 = vtanh.pop %v525
    %v533 = vmul.f32 %v531, %v471
    %535 = vrot.lane.b32.xlu0 %v532, 32
    %v536 = vpop.permute.xlu0 %535
    %v538 = vmul.f32 %v531, %v536
    %540 = vrot.lane.b32.xlu0 %v538, 32
    %v541 = vpop.permute.xlu0 %540
    %v543 = vadd.f32 %v533, %v541
    %v544 = vtanh.pop %v543
    %546 = vrot.lane.b32.xlu0 %v544, 32
    %v547 = vpop.permute.xlu0 %546
    %v549 = vmul.f32 %v531, %v547
    %v550 = vpack.c.bf16 %v549, %v549
    %552 = vrot.lane.b32.xlu0 %v550, 64
    %v553 = vpop.permute.xlu0 %552
    %v555 = vsel %vm193, %v553, 0
    %557 = vmatprep.subr.bf16.mxu0 0
    %558 = vmatpush1.bf16.msra.mxu0 %v189
    %559 = vmatprep.subr.bf16.mxu0 0
    %560 = vmatpush1.bf16.msra.mxu0 %v190
    %561 = vmatprep.subr.bf16.mxu0 0
    %562 = vmatpush1.bf16.msra.mxu0 0
    %563 = vmatprep.subr.bf16.mxu0 0
    %564 = vmatpush1.bf16.msra.mxu0 0
    %565 = vmatprep.subr.bf16.mxu0 0
    %566 = vmatpush1.bf16.msra.mxu0 0
    %567 = vmatprep.subr.bf16.mxu0 0
    %568 = vmatpush1.bf16.msra.mxu0 0
    %569 = vmatprep.subr.bf16.mxu0 0
    %570 = vmatpush1.bf16.msra.mxu0 0
    %571 = vmatprep.subr.bf16.mxu0 0
    %572 = vmatpush1.bf16.msra.mxu0 0
    %573 = vmatprep.subr.bf16.mxu0 0
    %574 = vmatpush1.bf16.msra.mxu0 0
    %575 = vmatprep.subr.bf16.mxu0 0
    %576 = vmatpush1.bf16.msra.mxu0 0
    %577 = vmatprep.subr.bf16.mxu0 0
    %578 = vmatpush1.bf16.msra.mxu0 0
    %579 = vmatprep.subr.bf16.mxu0 0
    %580 = vmatpush1.bf16.msra.mxu0 0
    %581 = vmatprep.subr.bf16.mxu0 0
    %582 = vmatpush1.bf16.msra.mxu0 0
    %583 = vmatprep.subr.bf16.mxu0 0
    %584 = vmatpush1.bf16.msra.mxu0 0
    %585 = vmatprep.subr.bf16.mxu0 0
    %586 = vmatpush1.bf16.msra.mxu0 0
    %587 = vmatprep.subr.bf16.mxu0 0
    %588 = vmatpush1.bf16.msra.mxu0 0
    %589 = vmatprep.mubr.bf16.mxu0 0
    %590 = vmatmul.mubr.bf16.gmra.mrb[0].mxu0 %v555
    %v591 = vpop.f32.mrb[0].mxu0
    %v592 = vadd.f32 0.0, %v591
    %v593 = vpop.f32.mrb[0].mxu0
    %v594 = vpop.f32.mrb[0].mxu0
    %v595 = vpop.f32.mrb[0].mxu0
    %596 = vdwg.mxu0
    %v597 = vadd.f32 %v150, %v592
    %v598 = vxor.u32 %v597, 2147483648
    %v599 = vmul.f32 %v598, 1.442695
    %v600 = vpow.pop %v599
    %v601 = vadd.f32 %v600, 1.0
    %v602 = vrcp.pop %v601
    %v603 = vmul.f32 1.0, %v602
    %v604 = vtanh.pop %v597
    %v605 = vmul.f32 %v603, %v543
    %607 = vrot.lane.b32.xlu0 %v604, 32
    %v608 = vpop.permute.xlu0 %607
    %v610 = vmul.f32 %v603, %v608
    %612 = vrot.lane.b32.xlu0 %v610, 32
    %v613 = vpop.permute.xlu0 %612
    %v615 = vadd.f32 %v605, %v613
    %v616 = vtanh.pop %v615
    %618 = vrot.lane.b32.xlu0 %v616, 32
    %v619 = vpop.permute.xlu0 %618
    %v621 = vmul.f32 %v603, %v619
    %v622 = vpack.c.bf16 %v621, %v621
    %624 = vrot.lane.b32.xlu0 %v622, 64
    %v625 = vpop.permute.xlu0 %624
    %v627 = vsel %vm193, %v625, 0
    %629 = vmatprep.subr.bf16.mxu0 0
    %630 = vmatpush1.bf16.msra.mxu0 %v189
    %631 = vmatprep.subr.bf16.mxu0 0
    %632 = vmatpush1.bf16.msra.mxu0 %v190
    %633 = vmatprep.subr.bf16.mxu0 0
    %634 = vmatpush1.bf16.msra.mxu0 0
    %635 = vmatprep.subr.bf16.mxu0 0
    %636 = vmatpush1.bf16.msra.mxu0 0
    %637 = vmatprep.subr.bf16.mxu0 0
    %638 = vmatpush1.bf16.msra.mxu0 0
    %639 = vmatprep.subr.bf16.mxu0 0
    %640 = vmatpush1.bf16.msra.mxu0 0
    %641 = vmatprep.subr.bf16.mxu0 0
    %642 = vmatpush1.bf16.msra.mxu0 0
    %643 = vmatprep.subr.bf16.mxu0 0
    %644 = vmatpush1.bf16.msra.mxu0 0
    %645 = vmatprep.subr.bf16.mxu0 0
    %646 = vmatpush1.bf16.msra.mxu0 0
    %647 = vmatprep.subr.bf16.mxu0 0
    %648 = vmatpush1.bf16.msra.mxu0 0
    %649 = vmatprep.subr.bf16.mxu0 0
    %650 = vmatpush1.bf16.msra.mxu0 0
    %651 = vmatprep.subr.bf16.mxu0 0
    %652 = vmatpush1.bf16.msra.mxu0 0
    %653 = vmatprep.subr.bf16.mxu0 0
    %654 = vmatpush1.bf16.msra.mxu0 0
    %655 = vmatprep.subr.bf16.mxu0 0
    %656 = vmatpush1.bf16.msra.mxu0 0
    %657 = vmatprep.subr.bf16.mxu0 0
    %658 = vmatpush1.bf16.msra.mxu0 0
    %659 = vmatprep.subr.bf16.mxu0 0
    %660 = vmatpush1.bf16.msra.mxu0 0
    %661 = vmatprep.mubr.bf16.mxu0 0
    %662 = vmatmul.mubr.bf16.gmra.mrb[0].mxu0 %v627
    %v663 = vpop.f32.mrb[0].mxu0
    %v664 = vadd.f32 0.0, %v663
    %v665 = vpop.f32.mrb[0].mxu0
    %v666 = vpop.f32.mrb[0].mxu0
    %v667 = vpop.f32.mrb[0].mxu0
    %668 = vdwg.mxu0
    %v669 = vadd.f32 %v151, %v664
    %v670 = vxor.u32 %v669, 2147483648
    %v671 = vmul.f32 %v670, 1.442695
    %v672 = vpow.pop %v671
    %v673 = vadd.f32 %v672, 1.0
    %v674 = vrcp.pop %v673
    %v675 = vmul.f32 1.0, %v674
    %v676 = vtanh.pop %v669
    %v677 = vmul.f32 %v675, %v615
    %679 = vrot.lane.b32.xlu0 %v676, 32
    %v680 = vpop.permute.xlu0 %679
    %v682 = vmul.f32 %v675, %v680
    %684 = vrot.lane.b32.xlu0 %v682, 32
    %v685 = vpop.permute.xlu0 %684
    %v687 = vadd.f32 %v677, %v685
    %v688 = vtanh.pop %v687
    %690 = vrot.lane.b32.xlu0 %v688, 32
    %v691 = vpop.permute.xlu0 %690
    %v693 = vmul.f32 %v675, %v691
    %v694 = vpack.c.bf16 %v693, %v693
    %696 = vrot.lane.b32.xlu0 %v694, 64
    %v697 = vpop.permute.xlu0 %696
    %v699 = vsel %vm193, %v697, 0
    %701 = vmatprep.subr.bf16.mxu0 0
    %702 = vmatpush1.bf16.msra.mxu0 %v189
    %703 = vmatprep.subr.bf16.mxu0 0
    %704 = vmatpush1.bf16.msra.mxu0 %v190
    %705 = vmatprep.subr.bf16.mxu0 0
    %706 = vmatpush1.bf16.msra.mxu0 0
    %707 = vmatprep.subr.bf16.mxu0 0
    %708 = vmatpush1.bf16.msra.mxu0 0
    %709 = vmatprep.subr.bf16.mxu0 0
    %710 = vmatpush1.bf16.msra.mxu0 0
    %711 = vmatprep.subr.bf16.mxu0 0
    %712 = vmatpush1.bf16.msra.mxu0 0
    %713 = vmatprep.subr.bf16.mxu0 0
    %714 = vmatpush1.bf16.msra.mxu0 0
    %715 = vmatprep.subr.bf16.mxu0 0
    %716 = vmatpush1.bf16.msra.mxu0 0
    %717 = vmatprep.subr.bf16.mxu0 0
    %718 = vmatpush1.bf16.msra.mxu0 0
    %719 = vmatprep.subr.bf16.mxu0 0
    %720 = vmatpush1.bf16.msra.mxu0 0
    %721 = vmatprep.subr.bf16.mxu0 0
    %722 = vmatpush1.bf16.msra.mxu0 0
    %723 = vmatprep.subr.bf16.mxu0 0
    %724 = vmatpush1.bf16.msra.mxu0 0
    %725 = vmatprep.subr.bf16.mxu0 0
    %726 = vmatpush1.bf16.msra.mxu0 0
    %727 = vmatprep.subr.bf16.mxu0 0
    %728 = vmatpush1.bf16.msra.mxu0 0
    %729 = vmatprep.subr.bf16.mxu0 0
    %730 = vmatpush1.bf16.msra.mxu0 0
    %731 = vmatprep.subr.bf16.mxu0 0
    %732 = vmatpush1.bf16.msra.mxu0 0
    %733 = vmatprep.mubr.bf16.mxu0 0
    %734 = vmatmul.mubr.bf16.gmra.mrb[0].mxu0 %v699
    %v735 = vpop.f32.mrb[0].mxu0
    %v736 = vadd.f32 0.0, %v735
    %v737 = vpop.f32.mrb[0].mxu0
    %v738 = vpop.f32.mrb[0].mxu0
    %v739 = vpop.f32.mrb[0].mxu0
    %740 = vdwg.mxu0
    %v741 = vadd.f32 %v152, %v736
    %v742 = vxor.u32 %v741, 2147483648
    %v743 = vmul.f32 %v742, 1.442695
    %v744 = vpow.pop %v743
    %v745 = vadd.f32 %v744, 1.0
    %v746 = vrcp.pop %v745
    %v747 = vmul.f32 1.0, %v746
    %v748 = vtanh.pop %v741
    %v749 = vmul.f32 %v747, %v687
    %751 = vrot.lane.b32.xlu0 %v748, 32
    %v752 = vpop.permute.xlu0 %751
    %v754 = vmul.f32 %v747, %v752
    %756 = vrot.lane.b32.xlu0 %v754, 32
    %v757 = vpop.permute.xlu0 %756
    %v759 = vadd.f32 %v749, %v757
    %v760 = vtanh.pop %v759
    %762 = vrot.lane.b32.xlu0 %v760, 32
    %v763 = vpop.permute.xlu0 %762
    %v765 = vmul.f32 %v747, %v763
    %v768 = vunpack.c.l.s4 1966171168
    %v769 = vunpack.c.0.s8 %v768
    %v770 = vlaneseq
    %v771 = vshrl.u32 %v770, 7
    %v772 = vsub.s32 %v769, %v771
    %v773 = vrot.slane %v261, %v772
    %v774 = vcombine.high %v773, %v773
    %v776 = vunpack.c.l.s4 1966171168
    %v777 = vunpack.c.0.s8 %v776
    %v778 = vlaneseq
    %v779 = vshrl.u32 %v778, 7
    %v780 = vsub.s32 %v777, %v779
    %v781 = vrot.slane %v773, %v780
    %v783 = vunpack.c.l.s4 1966171168
    %v784 = vunpack.c.0.s8 %v783
    %v785 = vlaneseq
    %v786 = vshrl.u32 %v785, 7
    %v787 = vsub.s32 %v784, %v786
    %v788 = vrot.slane %v774, %v787
    %v793 = vunpack.c.l.s4 1966171168
    %v794 = vunpack.c.0.s8 %v793
    %v795 = vlaneseq
    %v796 = vshrl.u32 %v795, 7
    %v797 = vsub.s32 %v794, %v796
    %v798 = vrot.slane %v333, %v797
    %v799 = vcombine.high %v798, %v798
    %v801 = vunpack.c.l.s4 1966171168
    %v802 = vunpack.c.0.s8 %v801
    %v803 = vlaneseq
    %v804 = vshrl.u32 %v803, 7
    %v805 = vsub.s32 %v802, %v804
    %v806 = vrot.slane %v798, %v805
    %v808 = vunpack.c.l.s4 1966171168
    %v809 = vunpack.c.0.s8 %v808
    %v810 = vlaneseq
    %v811 = vshrl.u32 %v810, 7
    %v812 = vsub.s32 %v809, %v811
    %v813 = vrot.slane %v799, %v812
    %v816 = vunpack.c.l.s4 1966171168
    %v817 = vunpack.c.0.s8 %v816
    %v818 = vlaneseq
    %v819 = vshrl.u32 %v818, 7
    %v820 = vsub.s32 %v817, %v819
    %v821 = vrot.slane %v405, %v820
    %v822 = vcombine.high %v821, %v821
    %v824 = vunpack.c.l.s4 1966171168
    %v825 = vunpack.c.0.s8 %v824
    %v826 = vlaneseq
    %v827 = vshrl.u32 %v826, 7
    %v828 = vsub.s32 %v825, %v827
    %v829 = vrot.slane %v821, %v828
    %v831 = vunpack.c.l.s4 1966171168
    %v832 = vunpack.c.0.s8 %v831
    %v833 = vlaneseq
    %v834 = vshrl.u32 %v833, 7
    %v835 = vsub.s32 %v832, %v834
    %v836 = vrot.slane %v822, %v835
    %v839 = vunpack.c.l.s4 1966171168
    %v840 = vunpack.c.0.s8 %v839
    %v841 = vlaneseq
    %v842 = vshrl.u32 %v841, 7
    %v843 = vsub.s32 %v840, %v842
    %v844 = vrot.slane %v477, %v843
    %v845 = vcombine.high %v844, %v844
    %v847 = vunpack.c.l.s4 1966171168
    %v848 = vunpack.c.0.s8 %v847
    %v849 = vlaneseq
    %v850 = vshrl.u32 %v849, 7
    %v851 = vsub.s32 %v848, %v850
    %v852 = vrot.slane %v844, %v851
    %v854 = vunpack.c.l.s4 1966171168
    %v855 = vunpack.c.0.s8 %v854
    %v856 = vlaneseq
    %v857 = vshrl.u32 %v856, 7
    %v858 = vsub.s32 %v855, %v857
    %v859 = vrot.slane %v845, %v858
    %v862 = vunpack.c.l.s4 1966171168
    %v863 = vunpack.c.0.s8 %v862
    %v864 = vlaneseq
    %v865 = vshrl.u32 %v864, 7
    %v866 = vsub.s32 %v863, %v865
    %v867 = vrot.slane %v549, %v866
    %v868 = vcombine.high %v867, %v867
    %v870 = vunpack.c.l.s4 1966171168
    %v871 = vunpack.c.0.s8 %v870
    %v872 = vlaneseq
    %v873 = vshrl.u32 %v872, 7
    %v874 = vsub.s32 %v871, %v873
    %v875 = vrot.slane %v867, %v874
    %v877 = vunpack.c.l.s4 1966171168
    %v878 = vunpack.c.0.s8 %v877
    %v879 = vlaneseq
    %v880 = vshrl.u32 %v879, 7
    %v881 = vsub.s32 %v878, %v880
    %v882 = vrot.slane %v868, %v881
    %v885 = vunpack.c.l.s4 1966171168
    %v886 = vunpack.c.0.s8 %v885
    %v887 = vlaneseq
    %v888 = vshrl.u32 %v887, 7
    %v889 = vsub.s32 %v886, %v888
    %v890 = vrot.slane %v621, %v889
    %v891 = vcombine.high %v890, %v890
    %v893 = vunpack.c.l.s4 1966171168
    %v894 = vunpack.c.0.s8 %v893
    %v895 = vlaneseq
    %v896 = vshrl.u32 %v895, 7
    %v897 = vsub.s32 %v894, %v896
    %v898 = vrot.slane %v890, %v897
    %v900 = vunpack.c.l.s4 1966171168
    %v901 = vunpack.c.0.s8 %v900
    %v902 = vlaneseq
    %v903 = vshrl.u32 %v902, 7
    %v904 = vsub.s32 %v901, %v903
    %v905 = vrot.slane %v891, %v904
    %v908 = vunpack.c.l.s4 1966171168
    %v909 = vunpack.c.0.s8 %v908
    %v910 = vlaneseq
    %v911 = vshrl.u32 %v910, 7
    %v912 = vsub.s32 %v909, %v911
    %v913 = vrot.slane %v693, %v912
    %v914 = vcombine.high %v913, %v913
    %v916 = vunpack.c.l.s4 1966171168
    %v917 = vunpack.c.0.s8 %v916
    %v918 = vlaneseq
    %v919 = vshrl.u32 %v918, 7
    %v920 = vsub.s32 %v917, %v919
    %v921 = vrot.slane %v913, %v920
    %v923 = vunpack.c.l.s4 1966171168
    %v924 = vunpack.c.0.s8 %v923
    %v925 = vlaneseq
    %v926 = vshrl.u32 %v925, 7
    %v927 = vsub.s32 %v924, %v926
    %v928 = vrot.slane %v914, %v927
    %v931 = vunpack.c.l.s4 1966171168
    %v932 = vunpack.c.0.s8 %v931
    %v933 = vlaneseq
    %v934 = vshrl.u32 %v933, 7
    %v935 = vsub.s32 %v932, %v934
    %v936 = vrot.slane %v765, %v935
    %v937 = vcombine.high %v936, %v936
    %v939 = vunpack.c.l.s4 1966171168
    %v940 = vunpack.c.0.s8 %v939
    %v941 = vlaneseq
    %v942 = vshrl.u32 %v941, 7
    %v943 = vsub.s32 %v940, %v942
    %v944 = vrot.slane %v936, %v943
    %v946 = vunpack.c.l.s4 1966171168
    %v947 = vunpack.c.0.s8 %v946
    %v948 = vlaneseq
    %v949 = vshrl.u32 %v948, 7
    %v950 = vsub.s32 %v947, %v949
    %v951 = vrot.slane %v937, %v950
    %v952 = vlaneseq
    %v953 = vshrl.u32 %v952, 7
    %v954 = vsub.s32 0, %v953
    %v955 = vrot.slane %v806, %v954
    %v956 = vlaneseq
    %v957 = vshrl.u32 %v956, 7
    %v958 = vsub.s32 0, %v957
    %v959 = vrot.slane %v813, %v958
    %v962 = vlaneseq
    %v963 = vshrl.u32 %v962, 7
    %v964 = vsub.s32 0, %v963
    %v965 = vrot.slane %v829, %v964
    %v966 = vlaneseq
    %v967 = vshrl.u32 %v966, 7
    %v968 = vsub.s32 0, %v967
    %v969 = vrot.slane %v836, %v968
    %v972 = vlaneseq
    %v973 = vshrl.u32 %v972, 7
    %v974 = vsub.s32 0, %v973
    %v975 = vrot.slane %v852, %v974
    %v976 = vlaneseq
    %v977 = vshrl.u32 %v976, 7
    %v978 = vsub.s32 0, %v977
    %v979 = vrot.slane %v859, %v978
    %v982 = vlaneseq
    %v983 = vshrl.u32 %v982, 7
    %v984 = vsub.s32 0, %v983
    %v985 = vrot.slane %v875, %v984
    %v986 = vlaneseq
    %v987 = vshrl.u32 %v986, 7
    %v988 = vsub.s32 0, %v987
    %v989 = vrot.slane %v882, %v988
    %v992 = vlaneseq
    %v993 = vshrl.u32 %v992, 7
    %v994 = vsub.s32 0, %v993
    %v995 = vrot.slane %v898, %v994
    %v996 = vlaneseq
    %v997 = vshrl.u32 %v996, 7
    %v998 = vsub.s32 0, %v997
    %v999 = vrot.slane %v905, %v998
    %v1002 = vlaneseq
    %v1003 = vshrl.u32 %v1002, 7
    %v1004 = vsub.s32 0, %v1003
    %v1005 = vrot.slane %v921, %v1004
    %v1006 = vlaneseq
    %v1007 = vshrl.u32 %v1006, 7
    %v1008 = vsub.s32 0, %v1007
    %v1009 = vrot.slane %v928, %v1008
    %v1012 = vlaneseq
    %v1013 = vshrl.u32 %v1012, 7
    %v1014 = vsub.s32 0, %v1013
    %v1015 = vrot.slane %v944, %v1014
    %v1016 = vlaneseq
    %v1017 = vshrl.u32 %v1016, 7
    %v1018 = vsub.s32 0, %v1017
    %v1019 = vrot.slane %v951, %v1018
    %vm1022 = vcmask 1040384
    %v1023 = vsel %vm1022, %v781, %v955
    %v1024 = vsel %vm1022, %v788, %v959
    %vm1025 = vcmask 1041408
    %v1026 = vsel %vm1025, %v1023, %v965
    %v1027 = vsel %vm1025, %v1024, %v969
    %vm1028 = vcmask 1042432
    %v1029 = vsel %vm1028, %v1026, %v975
    %v1030 = vsel %vm1028, %v1027, %v979
    %vm1031 = vcmask 1043456
    %v1032 = vsel %vm1031, %v1029, %v985
    %v1033 = vsel %vm1031, %v1030, %v989
    %vm1034 = vcmask 1044480
    %v1035 = vsel %vm1034, %v1032, %v995
    %v1036 = vsel %vm1034, %v1033, %v999
    %vm1037 = vcmask 1045504
    %v1038 = vsel %vm1037, %v1035, %v1005
    %v1039 = vsel %vm1037, %v1036, %v1009
    %vm1040 = vcmask 1046528
    %v1041 = vsel %vm1040, %v1038, %v1015
    %v1042 = vsel %vm1040, %v1039, %v1019
    %v1043 = vpack.c.bf16 %v765, %v765
    %1045 = vrot.lane.b32.xlu0 %v1043, 64
    %v1046 = vpop.permute.xlu0 %1045
    %v1051 = vunpack.c.l.b16 %v79
    %v1052 = vunpack.c.l.b16 %v80
    %v1053 = vunpack.c.l.b16 %v81
    %v1054 = vunpack.c.l.b16 %v82
    %v1055 = vpack.c.b16 %v1052, %v1051
    %v1056 = vpack.c.b16 %v1054, %v1053
    %v1060 = vsel %vm193, %v1046, 0
    %1062 = vmatprep.subr.bf16.mxu0 0
    %1063 = vmatpush1.bf16.msra.mxu0 %v1055
    %1064 = vmatprep.subr.bf16.mxu0 0
    %1065 = vmatpush1.bf16.msra.mxu0 %v1056
    %1066 = vmatprep.subr.bf16.mxu0 0
    %1067 = vmatpush1.bf16.msra.mxu0 0
    %1068 = vmatprep.subr.bf16.mxu0 0
    %1069 = vmatpush1.bf16.msra.mxu0 0
    %1070 = vmatprep.subr.bf16.mxu0 0
    %1071 = vmatpush1.bf16.msra.mxu0 0
    %1072 = vmatprep.subr.bf16.mxu0 0
    %1073 = vmatpush1.bf16.msra.mxu0 0
    %1074 = vmatprep.subr.bf16.mxu0 0
    %1075 = vmatpush1.bf16.msra.mxu0 0
    %1076 = vmatprep.subr.bf16.mxu0 0
    %1077 = vmatpush1.bf16.msra.mxu0 0
    %1078 = vmatprep.subr.bf16.mxu0 0
    %1079 = vmatpush1.bf16.msra.mxu0 0
    %1080 = vmatprep.subr.bf16.mxu0 0
    %1081 = vmatpush1.bf16.msra.mxu0 0
    %1082 = vmatprep.subr.bf16.mxu0 0
    %1083 = vmatpush1.bf16.msra.mxu0 0
    %1084 = vmatprep.subr.bf16.mxu0 0
    %1085 = vmatpush1.bf16.msra.mxu0 0
    %1086 = vmatprep.subr.bf16.mxu0 0
    %1087 = vmatpush1.bf16.msra.mxu0 0
    %1088 = vmatprep.subr.bf16.mxu0 0
    %1089 = vmatpush1.bf16.msra.mxu0 0
    %1090 = vmatprep.subr.bf16.mxu0 0
    %1091 = vmatpush1.bf16.msra.mxu0 0
    %1092 = vmatprep.subr.bf16.mxu0 0
    %1093 = vmatpush1.bf16.msra.mxu0 0
    %1094 = vmatprep.mubr.bf16.mxu0 0
    %1095 = vmatmul.mubr.bf16.gmra.mrb[0].mxu0 %v1060
    %v1096 = vpop.f32.mrb[0].mxu0
    %v1097 = vadd.f32 0.0, %v1096
    %v1098 = vpop.f32.mrb[0].mxu0
    %v1099 = vpop.f32.mrb[0].mxu0
    %v1100 = vpop.f32.mrb[0].mxu0
    %1101 = vdwg.mxu0
    %v1102 = vadd.f32 %v173, %v1097
    %v1103 = vxor.u32 %v1102, 2147483648
    %v1104 = vmul.f32 %v1103, 1.442695
    %v1105 = vpow.pop %v1104
    %v1106 = vadd.f32 %v1105, 1.0
    %v1107 = vrcp.pop %v1106
    %v1108 = vmul.f32 1.0, %v1107
    %v1109 = vtanh.pop %v1102
    %v1110 = vmul.f32 %v1108, 0.0
    %1112 = vrot.lane.b32.xlu0 %v1109, 32
    %v1113 = vpop.permute.xlu0 %1112
    %v1115 = vmul.f32 %v1108, %v1113
    %1117 = vrot.lane.b32.xlu0 %v1115, 32
    %v1118 = vpop.permute.xlu0 %1117
    %v1120 = vadd.f32 %v1110, %v1118
    %v1121 = vtanh.pop %v1120
    %1123 = vrot.lane.b32.xlu0 %v1121, 32
    %v1124 = vpop.permute.xlu0 %1123
    %v1126 = vmul.f32 %v1108, %v1124
    %v1127 = vpack.c.bf16 %v1126, %v1126
    %1129 = vrot.lane.b32.xlu0 %v1127, 64
    %v1130 = vpop.permute.xlu0 %1129
    %v1132 = vsel %vm193, %v1130, 0
    %1134 = vmatprep.subr.bf16.mxu0 0
    %1135 = vmatpush1.bf16.msra.mxu0 %v1055
    %1136 = vmatprep.subr.bf16.mxu0 0
    %1137 = vmatpush1.bf16.msra.mxu0 %v1056
    %1138 = vmatprep.subr.bf16.mxu0 0
    %1139 = vmatpush1.bf16.msra.mxu0 0
    %1140 = vmatprep.subr.bf16.mxu0 0
    %1141 = vmatpush1.bf16.msra.mxu0 0
    %1142 = vmatprep.subr.bf16.mxu0 0
    %1143 = vmatpush1.bf16.msra.mxu0 0
    %1144 = vmatprep.subr.bf16.mxu0 0
    %1145 = vmatpush1.bf16.msra.mxu0 0
    %1146 = vmatprep.subr.bf16.mxu0 0
    %1147 = vmatpush1.bf16.msra.mxu0 0
    %1148 = vmatprep.subr.bf16.mxu0 0
    %1149 = vmatpush1.bf16.msra.mxu0 0
    %1150 = vmatprep.subr.bf16.mxu0 0
    %1151 = vmatpush1.bf16.msra.mxu0 0
    %1152 = vmatprep.subr.bf16.mxu0 0
    %1153 = vmatpush1.bf16.msra.mxu0 0
    %1154 = vmatprep.subr.bf16.mxu0 0
    %1155 = vmatpush1.bf16.msra.mxu0 0
    %1156 = vmatprep.subr.bf16.mxu0 0
    %1157 = vmatpush1.bf16.msra.mxu0 0
    %1158 = vmatprep.subr.bf16.mxu0 0
    %1159 = vmatpush1.bf16.msra.mxu0 0
    %1160 = vmatprep.subr.bf16.mxu0 0
    %1161 = vmatpush1.bf16.msra.mxu0 0
    %1162 = vmatprep.subr.bf16.mxu0 0
    %1163 = vmatpush1.bf16.msra.mxu0 0
    %1164 = vmatprep.subr.bf16.mxu0 0
    %1165 = vmatpush1.bf16.msra.mxu0 0
    %1166 = vmatprep.mubr.bf16.mxu0 0
    %1167 = vmatmul.mubr.bf16.gmra.mrb[0].mxu0 %v1132
    %v1168 = vpop.f32.mrb[0].mxu0
    %v1169 = vadd.f32 0.0, %v1168
    %v1170 = vpop.f32.mrb[0].mxu0
    %v1171 = vpop.f32.mrb[0].mxu0
    %v1172 = vpop.f32.mrb[0].mxu0
    %1173 = vdwg.mxu0
    %v1174 = vadd.f32 %v174, %v1169
    %v1175 = vxor.u32 %v1174, 2147483648
    %v1176 = vmul.f32 %v1175, 1.442695
    %v1177 = vpow.pop %v1176
    %v1178 = vadd.f32 %v1177, 1.0
    %v1179 = vrcp.pop %v1178
    %v1180 = vmul.f32 1.0, %v1179
    %v1181 = vtanh.pop %v1174
    %v1182 = vmul.f32 %v1180, %v1120
    %1184 = vrot.lane.b32.xlu0 %v1181, 32
    %v1185 = vpop.permute.xlu0 %1184
    %v1187 = vmul.f32 %v1180, %v1185
    %1189 = vrot.lane.b32.xlu0 %v1187, 32
    %v1190 = vpop.permute.xlu0 %1189
    %v1192 = vadd.f32 %v1182, %v1190
    %v1193 = vtanh.pop %v1192
    %1195 = vrot.lane.b32.xlu0 %v1193, 32
    %v1196 = vpop.permute.xlu0 %1195
    %v1198 = vmul.f32 %v1180, %v1196
    %v1199 = vpack.c.bf16 %v1198, %v1198
    %1201 = vrot.lane.b32.xlu0 %v1199, 64
    %v1202 = vpop.permute.xlu0 %1201
    %v1204 = vsel %vm193, %v1202, 0
    %1206 = vmatprep.subr.bf16.mxu0 0
    %1207 = vmatpush1.bf16.msra.mxu0 %v1055
    %1208 = vmatprep.subr.bf16.mxu0 0
    %1209 = vmatpush1.bf16.msra.mxu0 %v1056
    %1210 = vmatprep.subr.bf16.mxu0 0
    %1211 = vmatpush1.bf16.msra.mxu0 0
    %1212 = vmatprep.subr.bf16.mxu0 0
    %1213 = vmatpush1.bf16.msra.mxu0 0
    %1214 = vmatprep.subr.bf16.mxu0 0
    %1215 = vmatpush1.bf16.msra.mxu0 0
    %1216 = vmatprep.subr.bf16.mxu0 0
    %1217 = vmatpush1.bf16.msra.mxu0 0
    %1218 = vmatprep.subr.bf16.mxu0 0
    %1219 = vmatpush1.bf16.msra.mxu0 0
    %1220 = vmatprep.subr.bf16.mxu0 0
    %1221 = vmatpush1.bf16.msra.mxu0 0
    %1222 = vmatprep.subr.bf16.mxu0 0
    %1223 = vmatpush1.bf16.msra.mxu0 0
    %1224 = vmatprep.subr.bf16.mxu0 0
    %1225 = vmatpush1.bf16.msra.mxu0 0
    %1226 = vmatprep.subr.bf16.mxu0 0
    %1227 = vmatpush1.bf16.msra.mxu0 0
    %1228 = vmatprep.subr.bf16.mxu0 0
    %1229 = vmatpush1.bf16.msra.mxu0 0
    %1230 = vmatprep.subr.bf16.mxu0 0
    %1231 = vmatpush1.bf16.msra.mxu0 0
    %1232 = vmatprep.subr.bf16.mxu0 0
    %1233 = vmatpush1.bf16.msra.mxu0 0
    %1234 = vmatprep.subr.bf16.mxu0 0
    %1235 = vmatpush1.bf16.msra.mxu0 0
    %1236 = vmatprep.subr.bf16.mxu0 0
    %1237 = vmatpush1.bf16.msra.mxu0 0
    %1238 = vmatprep.mubr.bf16.mxu0 0
    %1239 = vmatmul.mubr.bf16.gmra.mrb[0].mxu0 %v1204
    %v1240 = vpop.f32.mrb[0].mxu0
    %v1241 = vadd.f32 0.0, %v1240
    %v1242 = vpop.f32.mrb[0].mxu0
    %v1243 = vpop.f32.mrb[0].mxu0
    %v1244 = vpop.f32.mrb[0].mxu0
    %1245 = vdwg.mxu0
    %v1246 = vadd.f32 %v175, %v1241
    %v1247 = vxor.u32 %v1246, 2147483648
    %v1248 = vmul.f32 %v1247, 1.442695
    %v1249 = vpow.pop %v1248
    %v1250 = vadd.f32 %v1249, 1.0
    %v1251 = vrcp.pop %v1250
    %v1252 = vmul.f32 1.0, %v1251
    %v1253 = vtanh.pop %v1246
    %v1254 = vmul.f32 %v1252, %v1192
    %1256 = vrot.lane.b32.xlu0 %v1253, 32
    %v1257 = vpop.permute.xlu0 %1256
    %v1259 = vmul.f32 %v1252, %v1257
    %1261 = vrot.lane.b32.xlu0 %v1259, 32
    %v1262 = vpop.permute.xlu0 %1261
    %v1264 = vadd.f32 %v1254, %v1262
    %v1265 = vtanh.pop %v1264
    %1267 = vrot.lane.b32.xlu0 %v1265, 32
    %v1268 = vpop.permute.xlu0 %1267
    %v1270 = vmul.f32 %v1252, %v1268
    %v1271 = vpack.c.bf16 %v1270, %v1270
    %1273 = vrot.lane.b32.xlu0 %v1271, 64
    %v1274 = vpop.permute.xlu0 %1273
    %v1276 = vsel %vm193, %v1274, 0
    %1278 = vmatprep.subr.bf16.mxu0 0
    %1279 = vmatpush1.bf16.msra.mxu0 %v1055
    %1280 = vmatprep.subr.bf16.mxu0 0
    %1281 = vmatpush1.bf16.msra.mxu0 %v1056
    %1282 = vmatprep.subr.bf16.mxu0 0
    %1283 = vmatpush1.bf16.msra.mxu0 0
    %1284 = vmatprep.subr.bf16.mxu0 0
    %1285 = vmatpush1.bf16.msra.mxu0 0
    %1286 = vmatprep.subr.bf16.mxu0 0
    %1287 = vmatpush1.bf16.msra.mxu0 0
    %1288 = vmatprep.subr.bf16.mxu0 0
    %1289 = vmatpush1.bf16.msra.mxu0 0
    %1290 = vmatprep.subr.bf16.mxu0 0
    %1291 = vmatpush1.bf16.msra.mxu0 0
    %1292 = vmatprep.subr.bf16.mxu0 0
    %1293 = vmatpush1.bf16.msra.mxu0 0
    %1294 = vmatprep.subr.bf16.mxu0 0
    %1295 = vmatpush1.bf16.msra.mxu0 0
    %1296 = vmatprep.subr.bf16.mxu0 0
    %1297 = vmatpush1.bf16.msra.mxu0 0
    %1298 = vmatprep.subr.bf16.mxu0 0
    %1299 = vmatpush1.bf16.msra.mxu0 0
    %1300 = vmatprep.subr.bf16.mxu0 0
    %1301 = vmatpush1.bf16.msra.mxu0 0
    %1302 = vmatprep.subr.bf16.mxu0 0
    %1303 = vmatpush1.bf16.msra.mxu0 0
    %1304 = vmatprep.subr.bf16.mxu0 0
    %1305 = vmatpush1.bf16.msra.mxu0 0
    %1306 = vmatprep.subr.bf16.mxu0 0
    %1307 = vmatpush1.bf16.msra.mxu0 0
    %1308 = vmatprep.subr.bf16.mxu0 0
    %1309 = vmatpush1.bf16.msra.mxu0 0
    %1310 = vmatprep.mubr.bf16.mxu0 0
    %1311 = vmatmul.mubr.bf16.gmra.mrb[0].mxu0 %v1276
    %v1312 = vpop.f32.mrb[0].mxu0
    %v1313 = vadd.f32 0.0, %v1312
    %v1314 = vpop.f32.mrb[0].mxu0
    %v1315 = vpop.f32.mrb[0].mxu0
    %v1316 = vpop.f32.mrb[0].mxu0
    %1317 = vdwg.mxu0
    %v1318 = vadd.f32 %v176, %v1313
    %v1319 = vxor.u32 %v1318, 2147483648
    %v1320 = vmul.f32 %v1319, 1.442695
    %v1321 = vpow.pop %v1320
    %v1322 = vadd.f32 %v1321, 1.0
    %v1323 = vrcp.pop %v1322
    %v1324 = vmul.f32 1.0, %v1323
    %v1325 = vtanh.pop %v1318
    %v1326 = vmul.f32 %v1324, %v1264
    %1328 = vrot.lane.b32.xlu0 %v1325, 32
    %v1329 = vpop.permute.xlu0 %1328
    %v1331 = vmul.f32 %v1324, %v1329
    %1333 = vrot.lane.b32.xlu0 %v1331, 32
    %v1334 = vpop.permute.xlu0 %1333
    %v1336 = vadd.f32 %v1326, %v1334
    %v1337 = vtanh.pop %v1336
    %1339 = vrot.lane.b32.xlu0 %v1337, 32
    %v1340 = vpop.permute.xlu0 %1339
    %v1342 = vmul.f32 %v1324, %v1340
    %v1343 = vpack.c.bf16 %v1342, %v1342
    %1345 = vrot.lane.b32.xlu0 %v1343, 64
    %v1346 = vpop.permute.xlu0 %1345
    %v1348 = vsel %vm193, %v1346, 0
    %1350 = vmatprep.subr.bf16.mxu0 0
    %1351 = vmatpush1.bf16.msra.mxu0 %v1055
    %1352 = vmatprep.subr.bf16.mxu0 0
    %1353 = vmatpush1.bf16.msra.mxu0 %v1056
    %1354 = vmatprep.subr.bf16.mxu0 0
    %1355 = vmatpush1.bf16.msra.mxu0 0
    %1356 = vmatprep.subr.bf16.mxu0 0
    %1357 = vmatpush1.bf16.msra.mxu0 0
    %1358 = vmatprep.subr.bf16.mxu0 0
    %1359 = vmatpush1.bf16.msra.mxu0 0
    %1360 = vmatprep.subr.bf16.mxu0 0
    %1361 = vmatpush1.bf16.msra.mxu0 0
    %1362 = vmatprep.subr.bf16.mxu0 0
    %1363 = vmatpush1.bf16.msra.mxu0 0
    %1364 = vmatprep.subr.bf16.mxu0 0
    %1365 = vmatpush1.bf16.msra.mxu0 0
    %1366 = vmatprep.subr.bf16.mxu0 0
    %1367 = vmatpush1.bf16.msra.mxu0 0
    %1368 = vmatprep.subr.bf16.mxu0 0
    %1369 = vmatpush1.bf16.msra.mxu0 0
    %1370 = vmatprep.subr.bf16.mxu0 0
    %1371 = vmatpush1.bf16.msra.mxu0 0
    %1372 = vmatprep.subr.bf16.mxu0 0
    %1373 = vmatpush1.bf16.msra.mxu0 0
    %1374 = vmatprep.subr.bf16.mxu0 0
    %1375 = vmatpush1.bf16.msra.mxu0 0
    %1376 = vmatprep.subr.bf16.mxu0 0
    %1377 = vmatpush1.bf16.msra.mxu0 0
    %1378 = vmatprep.subr.bf16.mxu0 0
    %1379 = vmatpush1.bf16.msra.mxu0 0
    %1380 = vmatprep.subr.bf16.mxu0 0
    %1381 = vmatpush1.bf16.msra.mxu0 0
    %1382 = vmatprep.mubr.bf16.mxu0 0
    %1383 = vmatmul.mubr.bf16.gmra.mrb[0].mxu0 %v1348
    %v1384 = vpop.f32.mrb[0].mxu0
    %v1385 = vadd.f32 0.0, %v1384
    %v1386 = vpop.f32.mrb[0].mxu0
    %v1387 = vpop.f32.mrb[0].mxu0
    %v1388 = vpop.f32.mrb[0].mxu0
    %1389 = vdwg.mxu0
    %v1390 = vadd.f32 %v177, %v1385
    %v1391 = vxor.u32 %v1390, 2147483648
    %v1392 = vmul.f32 %v1391, 1.442695
    %v1393 = vpow.pop %v1392
    %v1394 = vadd.f32 %v1393, 1.0
    %v1395 = vrcp.pop %v1394
    %v1396 = vmul.f32 1.0, %v1395
    %v1397 = vtanh.pop %v1390
    %v1398 = vmul.f32 %v1396, %v1336
    %1400 = vrot.lane.b32.xlu0 %v1397, 32
    %v1401 = vpop.permute.xlu0 %1400
    %v1403 = vmul.f32 %v1396, %v1401
    %1405 = vrot.lane.b32.xlu0 %v1403, 32
    %v1406 = vpop.permute.xlu0 %1405
    %v1408 = vadd.f32 %v1398, %v1406
    %v1409 = vtanh.pop %v1408
    %1411 = vrot.lane.b32.xlu0 %v1409, 32
    %v1412 = vpop.permute.xlu0 %1411
    %v1414 = vmul.f32 %v1396, %v1412
    %v1415 = vpack.c.bf16 %v1414, %v1414
    %1417 = vrot.lane.b32.xlu0 %v1415, 64
    %v1418 = vpop.permute.xlu0 %1417
    %v1420 = vsel %vm193, %v1418, 0
    %1422 = vmatprep.subr.bf16.mxu0 0
    %1423 = vmatpush1.bf16.msra.mxu0 %v1055
    %1424 = vmatprep.subr.bf16.mxu0 0
    %1425 = vmatpush1.bf16.msra.mxu0 %v1056
    %1426 = vmatprep.subr.bf16.mxu0 0
    %1427 = vmatpush1.bf16.msra.mxu0 0
    %1428 = vmatprep.subr.bf16.mxu0 0
    %1429 = vmatpush1.bf16.msra.mxu0 0
    %1430 = vmatprep.subr.bf16.mxu0 0
    %1431 = vmatpush1.bf16.msra.mxu0 0
    %1432 = vmatprep.subr.bf16.mxu0 0
    %1433 = vmatpush1.bf16.msra.mxu0 0
    %1434 = vmatprep.subr.bf16.mxu0 0
    %1435 = vmatpush1.bf16.msra.mxu0 0
    %1436 = vmatprep.subr.bf16.mxu0 0
    %1437 = vmatpush1.bf16.msra.mxu0 0
    %1438 = vmatprep.subr.bf16.mxu0 0
    %1439 = vmatpush1.bf16.msra.mxu0 0
    %1440 = vmatprep.subr.bf16.mxu0 0
    %1441 = vmatpush1.bf16.msra.mxu0 0
    %1442 = vmatprep.subr.bf16.mxu0 0
    %1443 = vmatpush1.bf16.msra.mxu0 0
    %1444 = vmatprep.subr.bf16.mxu0 0
    %1445 = vmatpush1.bf16.msra.mxu0 0
    %1446 = vmatprep.subr.bf16.mxu0 0
    %1447 = vmatpush1.bf16.msra.mxu0 0
    %1448 = vmatprep.subr.bf16.mxu0 0
    %1449 = vmatpush1.bf16.msra.mxu0 0
    %1450 = vmatprep.subr.bf16.mxu0 0
    %1451 = vmatpush1.bf16.msra.mxu0 0
    %1452 = vmatprep.subr.bf16.mxu0 0
    %1453 = vmatpush1.bf16.msra.mxu0 0
    %1454 = vmatprep.mubr.bf16.mxu0 0
    %1455 = vmatmul.mubr.bf16.gmra.mrb[0].mxu0 %v1420
    %v1456 = vpop.f32.mrb[0].mxu0
    %v1457 = vadd.f32 0.0, %v1456
    %v1458 = vpop.f32.mrb[0].mxu0
    %v1459 = vpop.f32.mrb[0].mxu0
    %v1460 = vpop.f32.mrb[0].mxu0
    %1461 = vdwg.mxu0
    %v1462 = vadd.f32 %v178, %v1457
    %v1463 = vxor.u32 %v1462, 2147483648
    %v1464 = vmul.f32 %v1463, 1.442695
    %v1465 = vpow.pop %v1464
    %v1466 = vadd.f32 %v1465, 1.0
    %v1467 = vrcp.pop %v1466
    %v1468 = vmul.f32 1.0, %v1467
    %v1469 = vtanh.pop %v1462
    %v1470 = vmul.f32 %v1468, %v1408
    %1472 = vrot.lane.b32.xlu0 %v1469, 32
    %v1473 = vpop.permute.xlu0 %1472
    %v1475 = vmul.f32 %v1468, %v1473
    %1477 = vrot.lane.b32.xlu0 %v1475, 32
    %v1478 = vpop.permute.xlu0 %1477
    %v1480 = vadd.f32 %v1470, %v1478
    %v1481 = vtanh.pop %v1480
    %1483 = vrot.lane.b32.xlu0 %v1481, 32
    %v1484 = vpop.permute.xlu0 %1483
    %v1486 = vmul.f32 %v1468, %v1484
    %v1487 = vpack.c.bf16 %v1486, %v1486
    %1489 = vrot.lane.b32.xlu0 %v1487, 64
    %v1490 = vpop.permute.xlu0 %1489
    %v1492 = vsel %vm193, %v1490, 0
    %1494 = vmatprep.subr.bf16.mxu0 0
    %1495 = vmatpush1.bf16.msra.mxu0 %v1055
    %1496 = vmatprep.subr.bf16.mxu0 0
    %1497 = vmatpush1.bf16.msra.mxu0 %v1056
    %1498 = vmatprep.subr.bf16.mxu0 0
    %1499 = vmatpush1.bf16.msra.mxu0 0
    %1500 = vmatprep.subr.bf16.mxu0 0
    %1501 = vmatpush1.bf16.msra.mxu0 0
    %1502 = vmatprep.subr.bf16.mxu0 0
    %1503 = vmatpush1.bf16.msra.mxu0 0
    %1504 = vmatprep.subr.bf16.mxu0 0
    %1505 = vmatpush1.bf16.msra.mxu0 0
    %1506 = vmatprep.subr.bf16.mxu0 0
    %1507 = vmatpush1.bf16.msra.mxu0 0
    %1508 = vmatprep.subr.bf16.mxu0 0
    %1509 = vmatpush1.bf16.msra.mxu0 0
    %1510 = vmatprep.subr.bf16.mxu0 0
    %1511 = vmatpush1.bf16.msra.mxu0 0
    %1512 = vmatprep.subr.bf16.mxu0 0
    %1513 = vmatpush1.bf16.msra.mxu0 0
    %1514 = vmatprep.subr.bf16.mxu0 0
    %1515 = vmatpush1.bf16.msra.mxu0 0
    %1516 = vmatprep.subr.bf16.mxu0 0
    %1517 = vmatpush1.bf16.msra.mxu0 0
    %1518 = vmatprep.subr.bf16.mxu0 0
    %1519 = vmatpush1.bf16.msra.mxu0 0
    %1520 = vmatprep.subr.bf16.mxu0 0
    %1521 = vmatpush1.bf16.msra.mxu0 0
    %1522 = vmatprep.subr.bf16.mxu0 0
    %1523 = vmatpush1.bf16.msra.mxu0 0
    %1524 = vmatprep.subr.bf16.mxu0 0
    %1525 = vmatpush1.bf16.msra.mxu0 0
    %1526 = vmatprep.mubr.bf16.mxu0 0
    %1527 = vmatmul.mubr.bf16.gmra.mrb[0].mxu0 %v1492
    %v1528 = vpop.f32.mrb[0].mxu0
    %v1529 = vadd.f32 0.0, %v1528
    %v1530 = vpop.f32.mrb[0].mxu0
    %v1531 = vpop.f32.mrb[0].mxu0
    %v1532 = vpop.f32.mrb[0].mxu0
    %1533 = vdwg.mxu0
    %v1534 = vadd.f32 %v179, %v1529
    %v1535 = vxor.u32 %v1534, 2147483648
    %v1536 = vmul.f32 %v1535, 1.442695
    %v1537 = vpow.pop %v1536
    %v1538 = vadd.f32 %v1537, 1.0
    %v1539 = vrcp.pop %v1538
    %v1540 = vmul.f32 1.0, %v1539
    %v1541 = vtanh.pop %v1534
    %v1542 = vmul.f32 %v1540, %v1480
    %1544 = vrot.lane.b32.xlu0 %v1541, 32
    %v1545 = vpop.permute.xlu0 %1544
    %v1547 = vmul.f32 %v1540, %v1545
    %1549 = vrot.lane.b32.xlu0 %v1547, 32
    %v1550 = vpop.permute.xlu0 %1549
    %v1552 = vadd.f32 %v1542, %v1550
    %v1553 = vtanh.pop %v1552
    %1555 = vrot.lane.b32.xlu0 %v1553, 32
    %v1556 = vpop.permute.xlu0 %1555
    %v1558 = vmul.f32 %v1540, %v1556
    %v1559 = vpack.c.bf16 %v1558, %v1558
    %1561 = vrot.lane.b32.xlu0 %v1559, 64
    %v1562 = vpop.permute.xlu0 %1561
    %v1564 = vsel %vm193, %v1562, 0
    %1566 = vmatprep.subr.bf16.mxu0 0
    %1567 = vmatpush1.bf16.msra.mxu0 %v1055
    %1568 = vmatprep.subr.bf16.mxu0 0
    %1569 = vmatpush1.bf16.msra.mxu0 %v1056
    %1570 = vmatprep.subr.bf16.mxu0 0
    %1571 = vmatpush1.bf16.msra.mxu0 0
    %1572 = vmatprep.subr.bf16.mxu0 0
    %1573 = vmatpush1.bf16.msra.mxu0 0
    %1574 = vmatprep.subr.bf16.mxu0 0
    %1575 = vmatpush1.bf16.msra.mxu0 0
    %1576 = vmatprep.subr.bf16.mxu0 0
    %1577 = vmatpush1.bf16.msra.mxu0 0
    %1578 = vmatprep.subr.bf16.mxu0 0
    %1579 = vmatpush1.bf16.msra.mxu0 0
    %1580 = vmatprep.subr.bf16.mxu0 0
    %1581 = vmatpush1.bf16.msra.mxu0 0
    %1582 = vmatprep.subr.bf16.mxu0 0
    %1583 = vmatpush1.bf16.msra.mxu0 0
    %1584 = vmatprep.subr.bf16.mxu0 0
    %1585 = vmatpush1.bf16.msra.mxu0 0
    %1586 = vmatprep.subr.bf16.mxu0 0
    %1587 = vmatpush1.bf16.msra.mxu0 0
    %1588 = vmatprep.subr.bf16.mxu0 0
    %1589 = vmatpush1.bf16.msra.mxu0 0
    %1590 = vmatprep.subr.bf16.mxu0 0
    %1591 = vmatpush1.bf16.msra.mxu0 0
    %1592 = vmatprep.subr.bf16.mxu0 0
    %1593 = vmatpush1.bf16.msra.mxu0 0
    %1594 = vmatprep.subr.bf16.mxu0 0
    %1595 = vmatpush1.bf16.msra.mxu0 0
    %1596 = vmatprep.subr.bf16.mxu0 0
    %1597 = vmatpush1.bf16.msra.mxu0 0
    %1598 = vmatprep.mubr.bf16.mxu0 0
    %1599 = vmatmul.mubr.bf16.gmra.mrb[0].mxu0 %v1564
    %v1600 = vpop.f32.mrb[0].mxu0
    %v1601 = vadd.f32 0.0, %v1600
    %v1602 = vpop.f32.mrb[0].mxu0
    %v1603 = vpop.f32.mrb[0].mxu0
    %v1604 = vpop.f32.mrb[0].mxu0
    %1605 = vdwg.mxu0
    %v1606 = vadd.f32 %v180, %v1601
    %v1607 = vxor.u32 %v1606, 2147483648
    %v1608 = vmul.f32 %v1607, 1.442695
    %v1609 = vpow.pop %v1608
    %v1610 = vadd.f32 %v1609, 1.0
    %v1611 = vrcp.pop %v1610
    %v1612 = vmul.f32 1.0, %v1611
    %v1613 = vtanh.pop %v1606
    %v1614 = vmul.f32 %v1612, %v1552
    %1616 = vrot.lane.b32.xlu0 %v1613, 32
    %v1617 = vpop.permute.xlu0 %1616
    %v1619 = vmul.f32 %v1612, %v1617
    %1621 = vrot.lane.b32.xlu0 %v1619, 32
    %v1622 = vpop.permute.xlu0 %1621
    %v1624 = vadd.f32 %v1614, %v1622
    %v1625 = vtanh.pop %v1624
    %1627 = vrot.lane.b32.xlu0 %v1625, 32
    %v1628 = vpop.permute.xlu0 %1627
    %v1630 = vmul.f32 %v1612, %v1628
    %v1633 = vunpack.c.l.s4 1966171168
    %v1634 = vunpack.c.0.s8 %v1633
    %v1635 = vlaneseq
    %v1636 = vshrl.u32 %v1635, 7
    %v1637 = vsub.s32 %v1634, %v1636
    %v1638 = vrot.slane %v1126, %v1637
    %v1639 = vcombine.high %v1638, %v1638
    %v1641 = vunpack.c.l.s4 1966171168
    %v1642 = vunpack.c.0.s8 %v1641
    %v1643 = vlaneseq
    %v1644 = vshrl.u32 %v1643, 7
    %v1645 = vsub.s32 %v1642, %v1644
    %v1646 = vrot.slane %v1638, %v1645
    %v1648 = vunpack.c.l.s4 1966171168
    %v1649 = vunpack.c.0.s8 %v1648
    %v1650 = vlaneseq
    %v1651 = vshrl.u32 %v1650, 7
    %v1652 = vsub.s32 %v1649, %v1651
    %v1653 = vrot.slane %v1639, %v1652
    %v1658 = vunpack.c.l.s4 1966171168
    %v1659 = vunpack.c.0.s8 %v1658
    %v1660 = vlaneseq
    %v1661 = vshrl.u32 %v1660, 7
    %v1662 = vsub.s32 %v1659, %v1661
    %v1663 = vrot.slane %v1198, %v1662
    %v1664 = vcombine.high %v1663, %v1663
    %v1666 = vunpack.c.l.s4 1966171168
    %v1667 = vunpack.c.0.s8 %v1666
    %v1668 = vlaneseq
    %v1669 = vshrl.u32 %v1668, 7
    %v1670 = vsub.s32 %v1667, %v1669
    %v1671 = vrot.slane %v1663, %v1670
    %v1673 = vunpack.c.l.s4 1966171168
    %v1674 = vunpack.c.0.s8 %v1673
    %v1675 = vlaneseq
    %v1676 = vshrl.u32 %v1675, 7
    %v1677 = vsub.s32 %v1674, %v1676
    %v1678 = vrot.slane %v1664, %v1677
    %v1681 = vunpack.c.l.s4 1966171168
    %v1682 = vunpack.c.0.s8 %v1681
    %v1683 = vlaneseq
    %v1684 = vshrl.u32 %v1683, 7
    %v1685 = vsub.s32 %v1682, %v1684
    %v1686 = vrot.slane %v1270, %v1685
    %v1687 = vcombine.high %v1686, %v1686
    %v1689 = vunpack.c.l.s4 1966171168
    %v1690 = vunpack.c.0.s8 %v1689
    %v1691 = vlaneseq
    %v1692 = vshrl.u32 %v1691, 7
    %v1693 = vsub.s32 %v1690, %v1692
    %v1694 = vrot.slane %v1686, %v1693
    %v1696 = vunpack.c.l.s4 1966171168
    %v1697 = vunpack.c.0.s8 %v1696
    %v1698 = vlaneseq
    %v1699 = vshrl.u32 %v1698, 7
    %v1700 = vsub.s32 %v1697, %v1699
    %v1701 = vrot.slane %v1687, %v1700
    %v1704 = vunpack.c.l.s4 1966171168
    %v1705 = vunpack.c.0.s8 %v1704
    %v1706 = vlaneseq
    %v1707 = vshrl.u32 %v1706, 7
    %v1708 = vsub.s32 %v1705, %v1707
    %v1709 = vrot.slane %v1342, %v1708
    %v1710 = vcombine.high %v1709, %v1709
    %v1712 = vunpack.c.l.s4 1966171168
    %v1713 = vunpack.c.0.s8 %v1712
    %v1714 = vlaneseq
    %v1715 = vshrl.u32 %v1714, 7
    %v1716 = vsub.s32 %v1713, %v1715
    %v1717 = vrot.slane %v1709, %v1716
    %v1719 = vunpack.c.l.s4 1966171168
    %v1720 = vunpack.c.0.s8 %v1719
    %v1721 = vlaneseq
    %v1722 = vshrl.u32 %v1721, 7
    %v1723 = vsub.s32 %v1720, %v1722
    %v1724 = vrot.slane %v1710, %v1723
    %v1727 = vunpack.c.l.s4 1966171168
    %v1728 = vunpack.c.0.s8 %v1727
    %v1729 = vlaneseq
    %v1730 = vshrl.u32 %v1729, 7
    %v1731 = vsub.s32 %v1728, %v1730
    %v1732 = vrot.slane %v1414, %v1731
    %v1733 = vcombine.high %v1732, %v1732
    %v1735 = vunpack.c.l.s4 1966171168
    %v1736 = vunpack.c.0.s8 %v1735
    %v1737 = vlaneseq
    %v1738 = vshrl.u32 %v1737, 7
    %v1739 = vsub.s32 %v1736, %v1738
    %v1740 = vrot.slane %v1732, %v1739
    %v1742 = vunpack.c.l.s4 1966171168
    %v1743 = vunpack.c.0.s8 %v1742
    %v1744 = vlaneseq
    %v1745 = vshrl.u32 %v1744, 7
    %v1746 = vsub.s32 %v1743, %v1745
    %v1747 = vrot.slane %v1733, %v1746
    %v1750 = vunpack.c.l.s4 1966171168
    %v1751 = vunpack.c.0.s8 %v1750
    %v1752 = vlaneseq
    %v1753 = vshrl.u32 %v1752, 7
    %v1754 = vsub.s32 %v1751, %v1753
    %v1755 = vrot.slane %v1486, %v1754
    %v1756 = vcombine.high %v1755, %v1755
    %v1758 = vunpack.c.l.s4 1966171168
    %v1759 = vunpack.c.0.s8 %v1758
    %v1760 = vlaneseq
    %v1761 = vshrl.u32 %v1760, 7
    %v1762 = vsub.s32 %v1759, %v1761
    %v1763 = vrot.slane %v1755, %v1762
    %v1765 = vunpack.c.l.s4 1966171168
    %v1766 = vunpack.c.0.s8 %v1765
    %v1767 = vlaneseq
    %v1768 = vshrl.u32 %v1767, 7
    %v1769 = vsub.s32 %v1766, %v1768
    %v1770 = vrot.slane %v1756, %v1769
    %v1773 = vunpack.c.l.s4 1966171168
    %v1774 = vunpack.c.0.s8 %v1773
    %v1775 = vlaneseq
    %v1776 = vshrl.u32 %v1775, 7
    %v1777 = vsub.s32 %v1774, %v1776
    %v1778 = vrot.slane %v1558, %v1777
    %v1779 = vcombine.high %v1778, %v1778
    %v1781 = vunpack.c.l.s4 1966171168
    %v1782 = vunpack.c.0.s8 %v1781
    %v1783 = vlaneseq
    %v1784 = vshrl.u32 %v1783, 7
    %v1785 = vsub.s32 %v1782, %v1784
    %v1786 = vrot.slane %v1778, %v1785
    %v1788 = vunpack.c.l.s4 1966171168
    %v1789 = vunpack.c.0.s8 %v1788
    %v1790 = vlaneseq
    %v1791 = vshrl.u32 %v1790, 7
    %v1792 = vsub.s32 %v1789, %v1791
    %v1793 = vrot.slane %v1779, %v1792
    %v1796 = vunpack.c.l.s4 1966171168
    %v1797 = vunpack.c.0.s8 %v1796
    %v1798 = vlaneseq
    %v1799 = vshrl.u32 %v1798, 7
    %v1800 = vsub.s32 %v1797, %v1799
    %v1801 = vrot.slane %v1630, %v1800
    %v1802 = vcombine.high %v1801, %v1801
    %v1804 = vunpack.c.l.s4 1966171168
    %v1805 = vunpack.c.0.s8 %v1804
    %v1806 = vlaneseq
    %v1807 = vshrl.u32 %v1806, 7
    %v1808 = vsub.s32 %v1805, %v1807
    %v1809 = vrot.slane %v1801, %v1808
    %v1811 = vunpack.c.l.s4 1966171168
    %v1812 = vunpack.c.0.s8 %v1811
    %v1813 = vlaneseq
    %v1814 = vshrl.u32 %v1813, 7
    %v1815 = vsub.s32 %v1812, %v1814
    %v1816 = vrot.slane %v1802, %v1815
    %v1817 = vlaneseq
    %v1818 = vshrl.u32 %v1817, 7
    %v1819 = vsub.s32 0, %v1818
    %v1820 = vrot.slane %v1671, %v1819
    %v1821 = vlaneseq
    %v1822 = vshrl.u32 %v1821, 7
    %v1823 = vsub.s32 0, %v1822
    %v1824 = vrot.slane %v1678, %v1823
    %v1827 = vlaneseq
    %v1828 = vshrl.u32 %v1827, 7
    %v1829 = vsub.s32 0, %v1828
    %v1830 = vrot.slane %v1694, %v1829
    %v1831 = vlaneseq
    %v1832 = vshrl.u32 %v1831, 7
    %v1833 = vsub.s32 0, %v1832
    %v1834 = vrot.slane %v1701, %v1833
    %v1837 = vlaneseq
    %v1838 = vshrl.u32 %v1837, 7
    %v1839 = vsub.s32 0, %v1838
    %v1840 = vrot.slane %v1717, %v1839
    %v1841 = vlaneseq
    %v1842 = vshrl.u32 %v1841, 7
    %v1843 = vsub.s32 0, %v1842
    %v1844 = vrot.slane %v1724, %v1843
    %v1847 = vlaneseq
    %v1848 = vshrl.u32 %v1847, 7
    %v1849 = vsub.s32 0, %v1848
    %v1850 = vrot.slane %v1740, %v1849
    %v1851 = vlaneseq
    %v1852 = vshrl.u32 %v1851, 7
    %v1853 = vsub.s32 0, %v1852
    %v1854 = vrot.slane %v1747, %v1853
    %v1857 = vlaneseq
    %v1858 = vshrl.u32 %v1857, 7
    %v1859 = vsub.s32 0, %v1858
    %v1860 = vrot.slane %v1763, %v1859
    %v1861 = vlaneseq
    %v1862 = vshrl.u32 %v1861, 7
    %v1863 = vsub.s32 0, %v1862
    %v1864 = vrot.slane %v1770, %v1863
    %v1867 = vlaneseq
    %v1868 = vshrl.u32 %v1867, 7
    %v1869 = vsub.s32 0, %v1868
    %v1870 = vrot.slane %v1786, %v1869
    %v1871 = vlaneseq
    %v1872 = vshrl.u32 %v1871, 7
    %v1873 = vsub.s32 0, %v1872
    %v1874 = vrot.slane %v1793, %v1873
    %v1877 = vlaneseq
    %v1878 = vshrl.u32 %v1877, 7
    %v1879 = vsub.s32 0, %v1878
    %v1880 = vrot.slane %v1809, %v1879
    %v1881 = vlaneseq
    %v1882 = vshrl.u32 %v1881, 7
    %v1883 = vsub.s32 0, %v1882
    %v1884 = vrot.slane %v1816, %v1883
    %v1887 = vsel %vm1022, %v1646, %v1820
    %v1888 = vsel %vm1022, %v1653, %v1824
    %v1889 = vsel %vm1025, %v1887, %v1830
    %v1890 = vsel %vm1025, %v1888, %v1834
    %v1891 = vsel %vm1028, %v1889, %v1840
    %v1892 = vsel %vm1028, %v1890, %v1844
    %v1893 = vsel %vm1031, %v1891, %v1850
    %v1894 = vsel %vm1031, %v1892, %v1854
    %v1895 = vsel %vm1034, %v1893, %v1860
    %v1896 = vsel %vm1034, %v1894, %v1864
    %v1897 = vsel %vm1037, %v1895, %v1870
    %v1898 = vsel %vm1037, %v1896, %v1874
    %v1899 = vsel %vm1040, %v1897, %v1880
    %v1900 = vsel %vm1040, %v1898, %v1884
    %1902 = vrot.lane.b32.xlu0 %v1899, 64
    %v1903 = vpop.permute.xlu0 %1902
    %1905 = vrot.lane.b32.xlu0 %v1041, 64
    %v1906 = vpop.permute.xlu0 %1905
    %v1907 = vsel %vm193, %v1903, 0
    %v1909 = vsel %vm193, %v1906, 0
    %1911 = vmatprep.subr.mxu0 0.0
    %1912 = vmatpush1.xpose.msra.mxu0 %v1909
    %1913 = vmatprep.subr.mxu0 0.0
    %1914 = vmatpush1.xpose.msra.mxu0 0.0
    %1915 = vmatprep.subr.mxu0 0.0
    %1916 = vmatpush1.xpose.msra.mxu0 0.0
    %1917 = vmatprep.subr.mxu0 0.0
    %1918 = vmatpush1.xpose.msra.mxu0 0.0
    %1919 = vmatprep.subr.mxu0 0.0
    %1920 = vmatpush1.xpose.msra.mxu0 0.0
    %1921 = vmatprep.subr.mxu0 0.0
    %1922 = vmatpush1.xpose.msra.mxu0 0.0
    %1923 = vmatprep.subr.mxu0 0.0
    %1924 = vmatpush1.xpose.msra.mxu0 0.0
    %1925 = vmatprep.subr.mxu0 0.0
    %1926 = vmatpush1.xpose.msra.mxu0 0.0
    %1927 = vmatprep.subr.mxu0 0.0
    %1928 = vmatpush1.xpose.msra.mxu0 0.0
    %1929 = vmatprep.subr.mxu0 0.0
    %1930 = vmatpush1.xpose.msra.mxu0 0.0
    %1931 = vmatprep.subr.mxu0 0.0
    %1932 = vmatpush1.xpose.msra.mxu0 0.0
    %1933 = vmatprep.subr.mxu0 0.0
    %1934 = vmatpush1.xpose.msra.mxu0 0.0
    %1935 = vmatprep.subr.mxu0 0.0
    %1936 = vmatpush1.xpose.msra.mxu0 0.0
    %1937 = vmatprep.subr.mxu0 0.0
    %1938 = vmatpush1.xpose.msra.mxu0 0.0
    %1939 = vmatprep.subr.mxu0 0.0
    %1940 = vmatpush1.xpose.msra.mxu0 0.0
    %1941 = vmatprep.subr.mxu0 0.0
    %1942 = vmatpush1.xpose.msra.mxu0 0.0
    %1943 = vmatprep.subr.mxu0 0.0
    %1944 = vmatpush1.xpose.msra.mxu0 0.0
    %1945 = vmatprep.subr.mxu0 0.0
    %1946 = vmatpush1.xpose.msra.mxu0 0.0
    %1947 = vmatprep.subr.mxu0 0.0
    %1948 = vmatpush1.xpose.msra.mxu0 0.0
    %1949 = vmatprep.subr.mxu0 0.0
    %1950 = vmatpush1.xpose.msra.mxu0 0.0
    %1951 = vmatprep.subr.mxu0 0.0
    %1952 = vmatpush1.xpose.msra.mxu0 0.0
    %1953 = vmatprep.subr.mxu0 0.0
    %1954 = vmatpush1.xpose.msra.mxu0 0.0
    %1955 = vmatprep.subr.mxu0 0.0
    %1956 = vmatpush1.xpose.msra.mxu0 0.0
    %1957 = vmatprep.subr.mxu0 0.0
    %1958 = vmatpush1.xpose.msra.mxu0 0.0
    %1959 = vmatprep.subr.mxu0 0.0
    %1960 = vmatpush1.xpose.msra.mxu0 0.0
    %1961 = vmatprep.subr.mxu0 0.0
    %1962 = vmatpush1.xpose.msra.mxu0 0.0
    %1963 = vmatprep.subr.mxu0 0.0
    %1964 = vmatpush1.xpose.msra.mxu0 0.0
    %1965 = vmatprep.subr.mxu0 0.0
    %1966 = vmatpush1.xpose.msra.mxu0 0.0
    %1967 = vmatprep.subr.mxu0 0.0
    %1968 = vmatpush1.xpose.msra.mxu0 0.0
    %1969 = vmatprep.subr.mxu0 0.0
    %1970 = vmatpush1.xpose.msra.mxu0 0.0
    %1971 = vmatprep.subr.mxu0 0.0
    %1972 = vmatpush1.xpose.msra.mxu0 0.0
    %1973 = vmatprep.subr.mxu0 0.0
    %1974 = vmatpush1.xpose.msra.mxu0 0.0
    %1975 = vmatprep.mubr.f32.mxu0 0.0
    %1976 = vmatmul.mubr.f32.gmra.mrb[0].mxu0 %v1907
    %v1977 = vpop.f32.mrb[0].mxu0
    %v1978 = vadd.f32 0.0, %v1977
    %v1979 = vpop.f32.mrb[0].mxu0
    %1980 = vdwg.mxu0
    %1982 = vrot.lane.b32.xlu0 %v1900, 64
    %v1983 = vpop.permute.xlu0 %1982
    %1985 = vrot.lane.b32.xlu0 %v1042, 64
    %v1986 = vpop.permute.xlu0 %1985
    %v1987 = vsel %vm193, %v1983, 0
    %v1989 = vsel %vm193, %v1986, 0
    %1991 = vmatprep.subr.mxu0 0.0
    %1992 = vmatpush1.xpose.msra.mxu0 %v1989
    %1993 = vmatprep.subr.mxu0 0.0
    %1994 = vmatpush1.xpose.msra.mxu0 0.0
    %1995 = vmatprep.subr.mxu0 0.0
    %1996 = vmatpush1.xpose.msra.mxu0 0.0
    %1997 = vmatprep.subr.mxu0 0.0
    %1998 = vmatpush1.xpose.msra.mxu0 0.0
    %1999 = vmatprep.subr.mxu0 0.0
    %2000 = vmatpush1.xpose.msra.mxu0 0.0
    %2001 = vmatprep.subr.mxu0 0.0
    %2002 = vmatpush1.xpose.msra.mxu0 0.0
    %2003 = vmatprep.subr.mxu0 0.0
    %2004 = vmatpush1.xpose.msra.mxu0 0.0
    %2005 = vmatprep.subr.mxu0 0.0
    %2006 = vmatpush1.xpose.msra.mxu0 0.0
    %2007 = vmatprep.subr.mxu0 0.0
    %2008 = vmatpush1.xpose.msra.mxu0 0.0
    %2009 = vmatprep.subr.mxu0 0.0
    %2010 = vmatpush1.xpose.msra.mxu0 0.0
    %2011 = vmatprep.subr.mxu0 0.0
    %2012 = vmatpush1.xpose.msra.mxu0 0.0
    %2013 = vmatprep.subr.mxu0 0.0
    %2014 = vmatpush1.xpose.msra.mxu0 0.0
    %2015 = vmatprep.subr.mxu0 0.0
    %2016 = vmatpush1.xpose.msra.mxu0 0.0
    %2017 = vmatprep.subr.mxu0 0.0
    %2018 = vmatpush1.xpose.msra.mxu0 0.0
    %2019 = vmatprep.subr.mxu0 0.0
    %2020 = vmatpush1.xpose.msra.mxu0 0.0
    %2021 = vmatprep.subr.mxu0 0.0
    %2022 = vmatpush1.xpose.msra.mxu0 0.0
    %2023 = vmatprep.subr.mxu0 0.0
    %2024 = vmatpush1.xpose.msra.mxu0 0.0
    %2025 = vmatprep.subr.mxu0 0.0
    %2026 = vmatpush1.xpose.msra.mxu0 0.0
    %2027 = vmatprep.subr.mxu0 0.0
    %2028 = vmatpush1.xpose.msra.mxu0 0.0
    %2029 = vmatprep.subr.mxu0 0.0
    %2030 = vmatpush1.xpose.msra.mxu0 0.0
    %2031 = vmatprep.subr.mxu0 0.0
    %2032 = vmatpush1.xpose.msra.mxu0 0.0
    %2033 = vmatprep.subr.mxu0 0.0
    %2034 = vmatpush1.xpose.msra.mxu0 0.0
    %2035 = vmatprep.subr.mxu0 0.0
    %2036 = vmatpush1.xpose.msra.mxu0 0.0
    %2037 = vmatprep.subr.mxu0 0.0
    %2038 = vmatpush1.xpose.msra.mxu0 0.0
    %2039 = vmatprep.subr.mxu0 0.0
    %2040 = vmatpush1.xpose.msra.mxu0 0.0
    %2041 = vmatprep.subr.mxu0 0.0
    %2042 = vmatpush1.xpose.msra.mxu0 0.0
    %2043 = vmatprep.subr.mxu0 0.0
    %2044 = vmatpush1.xpose.msra.mxu0 0.0
    %2045 = vmatprep.subr.mxu0 0.0
    %2046 = vmatpush1.xpose.msra.mxu0 0.0
    %2047 = vmatprep.subr.mxu0 0.0
    %2048 = vmatpush1.xpose.msra.mxu0 0.0
    %2049 = vmatprep.subr.mxu0 0.0
    %2050 = vmatpush1.xpose.msra.mxu0 0.0
    %2051 = vmatprep.subr.mxu0 0.0
    %2052 = vmatpush1.xpose.msra.mxu0 0.0
    %2053 = vmatprep.subr.mxu0 0.0
    %2054 = vmatpush1.xpose.msra.mxu0 0.0
    %2055 = vmatprep.mubr.f32.mxu0 0.0
    %2056 = vmatmul.mubr.f32.gmra.mrb[0].mxu0 %v1987
    %v2057 = vpop.f32.mrb[0].mxu0
    %v2058 = vadd.f32 0.0, %v2057
    %v2059 = vpop.f32.mrb[0].mxu0
    %2060 = vdwg.mxu0
    %vm2061 = vcmask 64512
    %v2062 = vsel %vm2061, %v1978, -inf
    %2063 = vmax.xlane.f32.xlu0 %v2062
    %v2064 = vpop.xlane.xlu0 %2063
    %v2065 = vsel %vm2061, %v2058, -inf
    %2066 = vmax.xlane.f32.xlu0 %v2065
    %v2067 = vpop.xlane.xlu0 %2066
    %v2068 = vsub.f32 %v1978, %v2064
    %v2069 = vsub.f32 %v2058, %v2067
    %v2070 = vmul.f32 %v2068, 1.442695
    %v2071 = vpow.pop %v2070
    %v2072 = vmul.f32 %v2069, 1.442695
    %v2073 = vpow.pop %v2072
    %v2074 = vsel %vm2061, %v2071, 0.0
    %2075 = vadd.xlane.f32.xlu0 %v2074
    %v2076 = vpop.xlane.xlu0 %2075
    %v2077 = vsel %vm2061, %v2073, 0.0
    %2078 = vadd.xlane.f32.xlu0 %v2077
    %v2079 = vpop.xlane.xlu0 %2078
    %v2080 = vrcp.pop %v2076
    %v2081 = vmul.f32 %v2071, %v2080
    %v2082 = vrcp.pop %v2079
    %v2083 = vmul.f32 %v2073, %v2082
    %v2085 = vlaneseq
    %v2086 = vshrl.u32 %v2085, 7
    %v2087 = vsub.s32 0, %v2086
    %v2088 = vrot.slane %v83, %v2087
    %2089 = vrot.lane.b32.xlu0 %v2088, 64
    %v2090 = vpop.permute.xlu0 %2089
    %v2092 = vmul.f32 %v1041, %v2090
    %v2093 = vmul.f32 %v1042, %v2090
    %2096 = vrot.lane.b32.xlu0 %v2092, 64
    %v2097 = vpop.permute.xlu0 %2096
    %2098 = vrot.lane.b32.xlu0 %v2093, 64
    %v2099 = vpop.permute.xlu0 %2098
    %v2102 = vsel %vm193, %v2097, 0.0
    %2103 = vadd.xlane.f32.xlu0 %v2102
    %v2104 = vpop.xlane.xlu0 %2103
    %v2105 = vsel %vm193, %v2099, 0.0
    %2106 = vadd.xlane.f32.xlu0 %v2105
    %v2107 = vpop.xlane.xlu0 %2106
    %v2110 = vlaneseq
    %v2111 = vand.u32 %v2110, 127
    %v2112 = vlaneseq
    %v2113 = vshrl.u32 %v2112, 7
    %v2114 = vsub.s32 %v2111, %v2113
    %v2115 = vrot.slane %v2104, %v2114
    %v2116 = vlaneseq
    %v2117 = vshrl.u32 %v2116, 7
    %v2118 = vsub.s32 %v2111, %v2117
    %v2119 = vrot.slane %v2107, %v2118
    %vm2120 = vcmask 1041409
    %vm2121 = vcmask 1042434
    %v2122 = vsel %vm2121, %v2115, %v2115
    %vm2123 = vcmask 1043459
    %v2124 = vsel %vm2123, %v2115, %v2122
    %vm2125 = vcmask 1044484
    %v2126 = vsel %vm2125, %v2115, %v2124
    %vm2127 = vcmask 1045509
    %v2128 = vsel %vm2127, %v2115, %v2126
    %vm2129 = vcmask 1046534
    %v2130 = vsel %vm2129, %v2115, %v2128
    %vm2131 = vcmask 1047559
    %v2132 = vsel %vm2131, %v2115, %v2130
    %v2133 = vsel %vm2121, %v2119, %v2119
    %v2134 = vsel %vm2123, %v2119, %v2133
    %v2135 = vsel %vm2125, %v2119, %v2134
    %v2136 = vsel %vm2127, %v2119, %v2135
    %v2137 = vsel %vm2129, %v2119, %v2136
    %v2138 = vsel %vm2131, %v2119, %v2137
    %v2141 = vmul.f32 %v2081, %v2132
    %v2142 = vmul.f32 %v2083, %v2138
    %v2143 = vsel %vm2061, %v2141, 0.0
    %2144 = vadd.xlane.f32.xlu0 %v2143
    %v2145 = vpop.xlane.xlu0 %2144
    %v2146 = vsel %vm2061, %v2142, 0.0
    %2147 = vadd.xlane.f32.xlu0 %v2146
    %v2148 = vpop.xlane.xlu0 %2147
    %v2150 = vlaneseq
    %v2151 = vshrl.u32 %v2150, 7
    %v2152 = vsub.s32 0, %v2151
    %v2153 = vrot.slane %v84, %v2152
    %2154 = vrot.lane.b32.xlu0 %v2153, 64
    %v2155 = vpop.permute.xlu0 %2154
    %v2157 = vmul.f32 %v1899, %v2155
    %v2158 = vmul.f32 %v1900, %v2155
    %2161 = vrot.lane.b32.xlu0 %v2157, 64
    %v2162 = vpop.permute.xlu0 %2161
    %2163 = vrot.lane.b32.xlu0 %v2158, 64
    %v2164 = vpop.permute.xlu0 %2163
    %v2167 = vsel %vm193, %v2162, 0.0
    %2168 = vadd.xlane.f32.xlu0 %v2167
    %v2169 = vpop.xlane.xlu0 %2168
    %v2170 = vsel %vm193, %v2164, 0.0
    %2171 = vadd.xlane.f32.xlu0 %v2170
    %v2172 = vpop.xlane.xlu0 %2171
    %v2173 = vadd.f32 %v2145, %v2169
    %v2174 = vadd.f32 %v2148, %v2172
    %v2175 = vld [vmem:[#allocation2] sm:$0x1]
    %v2177 = vlaneseq
    %v2178 = vshrl.u32 %v2177, 7
    %v2179 = vsub.s32 0, %v2178
    %v2180 = vrot.slane %v2175, %v2179
    %2181 = vset.pattern.permute.xlu0 0
    %2182 = vperm.xlu0 %2181, %v2180
    %v2183 = vpop.permute.xlu0 %2182
    %v2185 = vadd.f32 %v2173, %v2183
    %v2186 = vadd.f32 %v2174, %v2183
    %v2189 = vlaneseq
    %v2190 = vshrl.u32 %v2189, 7
    %v2191 = vsub.s32 %v2111, %v2190
    %v2192 = vrot.slane %v2185, %v2191
    %v2193 = vlaneseq
    %v2194 = vshrl.u32 %v2193, 7
    %v2195 = vsub.s32 %v2111, %v2194
    %v2196 = vrot.slane %v2186, %v2195
    %v2197 = vsel %vm2120, %v2196, %v2192
    %vm2199 = vcmask 58368
    %2200 = vst.msk [vmem:[#allocation8] sm:$0x3] %vm2199, %v2197
    // Predicated region
    $region50: #{tpu_custom_call.1} parent=1 // pred_check
      _
    $region51: #{tpu_custom_call.1} parent=1 // pred_check_branch
      %2202 = sbr.rel (0) target = $region53
    $region52: #{tpu_custom_call.1} parent=1 // pred_region
      %s2204 = ssub.s32 32, 32
      %2205 = vsyncadd [#allocation5], %s2204
      %s2207 = sshll.u32 [#allocation8], 4
      %s2208 = int_to_ptr.vmem [resolvable:$true] %s2207
      %2210 = dma.vmem_to_hbm [thread:$0]  %s2208, 32, %s10, [#allocation5]
    $region53: #{tpu_custom_call.1} parent=1 // pred_fallthru
      _
    // Predicated region
    $region54: #{tpu_custom_call.1} parent=1 // pred_check
      _
    $region55: #{tpu_custom_call.1} parent=1 // pred_check_branch
      %2212 = sbr.rel (0) target = $region57
    $region56: #{tpu_custom_call.1} parent=1 // pred_region
      %2213 = dma.done [#allocation5], 32
    $region57: #{tpu_custom_call.1} parent=1 // pred_fallthru
      _
    %2214 = vsyncpa [#allocation4], 1
    %2215 = vsyncpa [#allocation7], 1
    %2216 = vsyncpa [#allocation5], 1

</llo_original>
